<compile_context>
chip_gen: v7x
topology: tpu7x:2x2x1
jax: 0.10.0
libtpu: 0.0.40
codegen_flags: <defaults>
</compile_context>

<pallas_src>
import jax
import jax.numpy as jnp
from jax.experimental import pallas as pl
from jax.experimental.pallas import tpu as pltpu


def _round_up(a, m):
    return (a + m - 1) // m * m


def _elu(x):
    # ELU, alpha=1.0 (PyTorch default). exp(min(x,0)) - 1 never overflows.
    return jnp.where(x > 0, x, jnp.exp(jnp.minimum(x, 0.0)) - 1.0)


def _stable_sigmoid(z):
    # Never exponentiates a positive number -> no overflow.
    e = jnp.exp(-jnp.abs(z))
    r = 1.0 / (1.0 + e)
    return jnp.where(z >= 0, r, e * r)


_DOT_KW = dict(preferred_element_type=jnp.float32,
               precision=jax.lax.Precision.HIGHEST)


def _make_mlp_kernel(num_linear):
    """Kernel for a `num_linear`-layer MLP computed transposed: (features, TB)."""

    def kernel(*refs):
        x_ref, o_ref = refs[0], refs[-1]
        wb = refs[1:-1]                 # w1t, b1t, w2t, b2t, ..., wLt, bLt

        # Layer 1: (h0, TB) = w1t @ x^T   (batch lands on the 128-lane axis).
        h = jax.lax.dot_general(wb[0][...], x_ref[...],
                                dimension_numbers=(((1,), (1,)), ((), ())),
                                **_DOT_KW)
        h = _elu(h + wb[1][...])

        # Hidden layers: plain (h_i, h_{i-1}) @ (h_{i-1}, TB) matmuls, lane-dense ELU.
        for li in range(1, num_linear - 1):
            h = jax.lax.dot_general(wb[2 * li][...], h,
                                    dimension_numbers=(((1,), (0,)), ((), ())),
                                    **_DOT_KW)
            h = _elu(h + wb[2 * li + 1][...])
            # TODO(synk): training-mode Dropout(p=0.4) (pltpu.prng_random_bits)
            # not implemented; eval-mode identity is used.

        # Output layer: (C, TB), lane-dense store.
        z = jax.lax.dot_general(wb[-2][...], h,
                                dimension_numbers=(((1,), (0,)), ((), ())),
                                **_DOT_KW)
        o_ref[...] = _stable_sigmoid(z + wb[-1][...])

    return kernel


def neural_net_forward(x, params, *, tb_target=32768):
    """Fused MLP forward pass.

    x:       [batch, input_size] float32
    params:  dict with w{i} [fan_in, fan_out], b{i} [1, fan_out]
    returns: [batch, num_classes] float32
    """
    batch, in_features = x.shape
    num_linear = len(params) // 2
    dims = [in_features] + [params[f"w{i}"].shape[1] for i in range(1, num_linear + 1)]
    num_classes = dims[-1]

    # Batch tile: multiple of 128 (lane axis of the transposed activations).
    # Capped so the 1-D grid has >= 2 steps (keeps both v7x TensorCores busy)
    # and at tb_target so 2x-buffered x tiles + f32 activations stay well under
    # the 32 MiB scoped VMEM limit on every generation (v7x has 64 MiB physical).
    tb = min(_round_up(tb_target, 128), _round_up(pl.cdiv(batch, 2), 128))
    tb = max(tb, 128)
    grid = (pl.cdiv(batch, tb),)

    # Pre-transpose the (tiny) weights/biases once: w -> (out, in), b -> (out, 1).
    wb_args, wb_specs = [], []
    for i in range(1, num_linear + 1):
        wt = params[f"w{i}"].T.astype(jnp.float32)
        bt = params[f"b{i}"].reshape(-1, 1).astype(jnp.float32)
        for a in (wt, bt):
            wb_args.append(a)
            wb_specs.append(pl.BlockSpec(a.shape, lambda i_: (0, 0)))

    flops = 2 * batch * sum(dims[i] * dims[i + 1] for i in range(len(dims) - 1))
    transcendentals = batch * sum(dims[1:])     # one exp per ELU / sigmoid element
    bytes_accessed = (4 * batch * (in_features + num_classes)
                      + 4 * sum(int(a.size) for a in wb_args))

    out_t = pl.pallas_call(
        _make_mlp_kernel(num_linear),
        out_shape=jax.ShapeDtypeStruct((num_classes, batch), jnp.float32),
        grid=grid,
        in_specs=[pl.BlockSpec((tb, in_features), lambda i_: (i_, 0))] + wb_specs,
        out_specs=pl.BlockSpec((num_classes, tb), lambda i_: (0, i_)),
        compiler_params=pltpu.CompilerParams(
            dimension_semantics=("parallel",),
            vmem_limit_bytes=32 << 20,
        ),
        cost_estimate=pl.CostEstimate(flops=flops,
                                      transcendentals=transcendentals,
                                      bytes_accessed=bytes_accessed),
    )(x, *wb_args)

    if num_classes == 1:
        return out_t.reshape(batch, 1)          # avoid emitting a transpose op
    return out_t.T


def init_params(key, input_size, hidden_sizes, num_classes):
    """PyTorch-style init: U(-1/sqrt(fan_in), 1/sqrt(fan_in)); weights stored [in, out]."""
    dims = [input_size] + list(hidden_sizes) + [num_classes]
    params = {}
    keys = jax.random.split(key, 2 * (len(dims) - 1))
    for i in range(len(dims) - 1):
        fan_in, fan_out = dims[i], dims[i + 1]
        bound = 1.0 / (fan_in ** 0.5)
        params[f"w{i + 1}"] = jax.random.uniform(
            keys[2 * i], (fan_in, fan_out), jnp.float32, minval=-bound, maxval=bound)
        params[f"b{i + 1}"] = jax.random.uniform(
            keys[2 * i + 1], (1, fan_out), jnp.float32, minval=-bound, maxval=bound)
    return params


def ref_forward(x, params):
    """Plain-JAX f32 reference matching the PyTorch eval-mode forward."""
    num_linear = len(params) // 2
    h = x
    for i in range(1, num_linear):
        h = jnp.dot(h, params[f"w{i}"], precision=jax.lax.Precision.HIGHEST) + params[f"b{i}"]
        h = jnp.where(h > 0, h, jnp.expm1(jnp.minimum(h, 0.0)))      # ELU
        # Dropout(p=0.4): identity in eval mode.
    z = jnp.dot(h, params[f"w{num_linear}"],
                precision=jax.lax.Precision.HIGHEST) + params[f"b{num_linear}"]
    return jax.nn.sigmoid(z)


if __name__ == "__main__":
    key = jax.random.PRNGKey(0)
    k_x, k_x2, k_p = jax.random.split(key, 3)

    input_size = 32
    hidden_sizes = [32, 16]   # Linear/ELU, Linear/ELU/Dropout, Linear/Sigmoid
    num_classes = 1
    params = init_params(k_p, input_size, hidden_sizes, num_classes)

    # Check 1: tiny batch (single partial tile: block > array, masked store).
    batch = 8
    x = jax.random.normal(k_x, (batch, input_size), dtype=jnp.float32)
    out = jax.block_until_ready(neural_net_forward(x, params))
    ref = ref_forward(x, params)
    assert out.shape == (batch, num_classes)
    err = float(jnp.max(jnp.abs(out - ref)))
    assert err < 2e-3, err

    # Check 2: multi-step grid with a ragged last block (300 = 256 + 44 rows).
    batch2 = 300
    x2 = jax.random.normal(k_x2, (batch2, input_size), dtype=jnp.float32)
    out2 = jax.block_until_ready(neural_net_forward(x2, params, tb_target=256))
    ref2 = ref_forward(x2, params)
    assert out2.shape == (batch2, num_classes)
    err2 = float(jnp.max(jnp.abs(out2 - ref2)))
    assert err2 < 2e-3, err2

    print("KERNEL_OK")
</pallas_src>

<mosaic_0001>
module attributes {stable_mosaic.version = 11 : i64} {
  func.func @kernel(%arg0: i32, %arg1: memref<128x32xf32, #tpu.memory_space<vmem>>, %arg2: memref<32x32xf32, #tpu.memory_space<vmem>>, %arg3: memref<32x1xf32, #tpu.memory_space<vmem>>, %arg4: memref<16x32xf32, #tpu.memory_space<vmem>>, %arg5: memref<16x1xf32, #tpu.memory_space<vmem>>, %arg6: memref<1x16xf32, #tpu.memory_space<vmem>>, %arg7: memref<1x1xf32, #tpu.memory_space<vmem>>, %arg8: memref<1x128xf32, #tpu.memory_space<vmem>>) attributes {dimension_semantics = [#tpu.dimension_semantics<parallel>], iteration_bounds = array<i64: 1>, scalar_prefetch = 0 : i64, scratch_operands = 0 : i64, tpu.core_type = #tpu.core_type<tc>, window_params = [{transform_indices = @transform_0, window_bounds = array<i64: 128, 32>}, {pipeline_mode = #tpu.pipeline_mode<synchronous>, transform_indices = @transform_1, window_bounds = array<i64: 32, 32>}, {pipeline_mode = #tpu.pipeline_mode<synchronous>, transform_indices = @transform_2, window_bounds = array<i64: 32, 1>}, {pipeline_mode = #tpu.pipeline_mode<synchronous>, transform_indices = @transform_3, window_bounds = array<i64: 16, 32>}, {pipeline_mode = #tpu.pipeline_mode<synchronous>, transform_indices = @transform_4, window_bounds = array<i64: 16, 1>}, {pipeline_mode = #tpu.pipeline_mode<synchronous>, transform_indices = @transform_5, window_bounds = array<i64: 1, 16>}, {pipeline_mode = #tpu.pipeline_mode<synchronous>, transform_indices = @transform_6, window_bounds = array<i64: 1, 1>}, {transform_indices = @transform_7, window_bounds = array<i64: 1, 128>}]} {
    %c0 = arith.constant 0 : index
    %c0_0 = arith.constant 0 : index
    %0 = vector.load %arg2[%c0, %c0_0] : memref<32x32xf32, #tpu.memory_space<vmem>>, vector<32x32xf32>
    %c0_1 = arith.constant 0 : index
    %c0_2 = arith.constant 0 : index
    %1 = vector.load %arg1[%c0_1, %c0_2] : memref<128x32xf32, #tpu.memory_space<vmem>>, vector<128x32xf32>
    %cst = arith.constant dense<0.000000e+00> : vector<32x128xf32>
    %2 = tpu.matmul %0, %1, %cst {dimension_numbers = #tpu.dot_dimension_numbers<[1], [1], [0], [0], [0, 0, 1, 0], [], []>, precision = #tpu.contract_precision<fp32>} : vector<32x32xf32>, vector<128x32xf32>, vector<32x128xf32> -> vector<32x128xf32>
    %c0_3 = arith.constant 0 : index
    %c0_4 = arith.constant 0 : index
    %3 = vector.load %arg3[%c0_3, %c0_4] : memref<32x1xf32, #tpu.memory_space<vmem>>, vector<32x1xf32>
    %4 = vector.broadcast %3 : vector<32x1xf32> to vector<32x128xf32>
    %5 = arith.addf %2, %4 : vector<32x128xf32>
    %cst_5 = arith.constant 0.000000e+00 : f32
    %6 = vector.broadcast %cst_5 : f32 to vector<32x128xf32>
    %7 = arith.cmpf ogt, %5, %6 : vector<32x128xf32>
    %cst_6 = arith.constant 0.000000e+00 : f32
    %8 = vector.broadcast %cst_6 : f32 to vector<32x128xf32>
    %9 = arith.minimumf %5, %8 : vector<32x128xf32>
    %10 = math.exp %9 : vector<32x128xf32>
    %cst_7 = arith.constant 1.000000e+00 : f32
    %11 = vector.broadcast %cst_7 : f32 to vector<32x128xf32>
    %12 = arith.subf %10, %11 : vector<32x128xf32>
    %13 = arith.select %7, %5, %12 : vector<32x128xi1>, vector<32x128xf32>
    %c0_8 = arith.constant 0 : index
    %c0_9 = arith.constant 0 : index
    %14 = vector.load %arg4[%c0_8, %c0_9] : memref<16x32xf32, #tpu.memory_space<vmem>>, vector<16x32xf32>
    %cst_10 = arith.constant dense<0.000000e+00> : vector<16x128xf32>
    %15 = tpu.matmul %14, %13, %cst_10 {dimension_numbers = #tpu.dot_dimension_numbers<[1], [0], [0], [1], [0, 0, 1, 1], [], []>, precision = #tpu.contract_precision<fp32>} : vector<16x32xf32>, vector<32x128xf32>, vector<16x128xf32> -> vector<16x128xf32>
    %c0_11 = arith.constant 0 : index
    %c0_12 = arith.constant 0 : index
    %16 = vector.load %arg5[%c0_11, %c0_12] : memref<16x1xf32, #tpu.memory_space<vmem>>, vector<16x1xf32>
    %17 = vector.broadcast %16 : vector<16x1xf32> to vector<16x128xf32>
    %18 = arith.addf %15, %17 : vector<16x128xf32>
    %cst_13 = arith.constant 0.000000e+00 : f32
    %19 = vector.broadcast %cst_13 : f32 to vector<16x128xf32>
    %20 = arith.cmpf ogt, %18, %19 : vector<16x128xf32>
    %cst_14 = arith.constant 0.000000e+00 : f32
    %21 = vector.broadcast %cst_14 : f32 to vector<16x128xf32>
    %22 = arith.minimumf %18, %21 : vector<16x128xf32>
    %23 = math.exp %22 : vector<16x128xf32>
    %cst_15 = arith.constant 1.000000e+00 : f32
    %24 = vector.broadcast %cst_15 : f32 to vector<16x128xf32>
    %25 = arith.subf %23, %24 : vector<16x128xf32>
    %26 = arith.select %20, %18, %25 : vector<16x128xi1>, vector<16x128xf32>
    %c0_16 = arith.constant 0 : index
    %c0_17 = arith.constant 0 : index
    %27 = vector.load %arg6[%c0_16, %c0_17] : memref<1x16xf32, #tpu.memory_space<vmem>>, vector<1x16xf32>
    %cst_18 = arith.constant dense<0.000000e+00> : vector<1x128xf32>
    %28 = tpu.matmul %27, %26, %cst_18 {dimension_numbers = #tpu.dot_dimension_numbers<[1], [0], [0], [1], [0, 0, 1, 1], [], []>, precision = #tpu.contract_precision<fp32>} : vector<1x16xf32>, vector<16x128xf32>, vector<1x128xf32> -> vector<1x128xf32>
    %c0_19 = arith.constant 0 : index
    %c0_20 = arith.constant 0 : index
    %29 = vector.load %arg7[%c0_19, %c0_20] : memref<1x1xf32, #tpu.memory_space<vmem>>, vector<1x1xf32>
    %30 = vector.broadcast %29 : vector<1x1xf32> to vector<1x128xf32>
    %31 = arith.addf %28, %30 : vector<1x128xf32>
    %32 = math.absf %31 : vector<1x128xf32>
    %cst_21 = arith.constant 0.000000e+00 : f32
    %33 = vector.broadcast %cst_21 : f32 to vector<1x128xf32>
    %34 = arith.subf %33, %32 : vector<1x128xf32>
    %35 = math.exp %34 : vector<1x128xf32>
    %cst_22 = arith.constant 1.000000e+00 : f32
    %36 = vector.broadcast %cst_22 : f32 to vector<1x128xf32>
    %37 = arith.addf %36, %35 : vector<1x128xf32>
    %cst_23 = arith.constant 1.000000e+00 : f32
    %38 = vector.broadcast %cst_23 : f32 to vector<1x128xf32>
    %39 = arith.divf %38, %37 : vector<1x128xf32>
    %cst_24 = arith.constant 0.000000e+00 : f32
    %40 = vector.broadcast %cst_24 : f32 to vector<1x128xf32>
    %41 = arith.cmpf oge, %31, %40 : vector<1x128xf32>
    %42 = arith.mulf %35, %39 : vector<1x128xf32>
    %43 = arith.select %41, %39, %42 : vector<1x128xi1>, vector<1x128xf32>
    %c0_25 = arith.constant 0 : index
    %c0_26 = arith.constant 0 : index
    %44 = vector.load %arg8[%c0_25, %c0_26] : memref<1x128xf32, #tpu.memory_space<vmem>>, vector<1x128xf32>
    tpu.vector_store %arg8[%c0_25, %c0_26], %43 {strides = array<i32>} : memref<1x128xf32, #tpu.memory_space<vmem>>, vector<1x128xf32>,
    return
  }
  func.func @transform_0(%arg0: i32) -> (i32, i32) {
    %c0_i32 = arith.constant 0 : i32
    %c0_i32_0 = arith.constant 0 : i32
    return %arg0, %c0_i32 : i32, i32
  }
  func.func @transform_1(%arg0: i32) -> (i32, i32) {
    %c0_i32 = arith.constant 0 : i32
    %c0_i32_0 = arith.constant 0 : i32
    %c0_i32_1 = arith.constant 0 : i32
    return %c0_i32, %c0_i32_0 : i32, i32
  }
  func.func @transform_2(%arg0: i32) -> (i32, i32) {
    %c0_i32 = arith.constant 0 : i32
    %c0_i32_0 = arith.constant 0 : i32
    %c0_i32_1 = arith.constant 0 : i32
    return %c0_i32, %c0_i32_0 : i32, i32
  }
  func.func @transform_3(%arg0: i32) -> (i32, i32) {
    %c0_i32 = arith.constant 0 : i32
    %c0_i32_0 = arith.constant 0 : i32
    %c0_i32_1 = arith.constant 0 : i32
    return %c0_i32, %c0_i32_0 : i32, i32
  }
  func.func @transform_4(%arg0: i32) -> (i32, i32) {
    %c0_i32 = arith.constant 0 : i32
    %c0_i32_0 = arith.constant 0 : i32
    %c0_i32_1 = arith.constant 0 : i32
    return %c0_i32, %c0_i32_0 : i32, i32
  }
  func.func @transform_5(%arg0: i32) -> (i32, i32) {
    %c0_i32 = arith.constant 0 : i32
    %c0_i32_0 = arith.constant 0 : i32
    %c0_i32_1 = arith.constant 0 : i32
    return %c0_i32, %c0_i32_0 : i32, i32
  }
  func.func @transform_6(%arg0: i32) -> (i32, i32) {
    %c0_i32 = arith.constant 0 : i32
    %c0_i32_0 = arith.constant 0 : i32
    %c0_i32_1 = arith.constant 0 : i32
    return %c0_i32, %c0_i32_0 : i32, i32
  }
  func.func @transform_7(%arg0: i32) -> (i32, i32) {
    %c0_i32 = arith.constant 0 : i32
    %c0_i32_0 = arith.constant 0 : i32
    return %c0_i32, %arg0 : i32, i32
  }
}

</mosaic_0001>

<llo_original>
// kernel: tpu_custom_call.1
$region0: #{tpu_custom_call.1}
  #allocation0 [shape = 'u32[]', space=smem, size = 0x4, offset = 0x4, fixed_abs, tag = 'smem constant byte address 0x4 - core index']
  #allocation1 [shape = 'u32[144,128]{1,0:T(1,128)}', space=vmem, size = 0x12000, scoped, tag = 'internal scratch']
  #allocation2 [shape = 'f32[1,1]{1,0:T(1,128)S(1)}', space=vmem, size = 0x200, scoped, tag = 'scoped memory for tpu_custom_call.1']
  %s0 = inlined_call_operand.vmem [shape: f32[8,32], index: 0, kind: input, shape index: {}]
  %s1 = inlined_call_operand.vmem [shape: f32[32,32], index: 1, kind: input, shape index: {}]
  %s2 = inlined_call_operand.vmem [shape: f32[32,1], index: 2, kind: input, shape index: {}]
  %s3 = inlined_call_operand.vmem [shape: f32[16,32], index: 3, kind: input, shape index: {}]
  %s4 = inlined_call_operand.vmem [shape: f32[16,1], index: 4, kind: input, shape index: {}]
  %s5 = inlined_call_operand.vmem [shape: f32[1,16], index: 5, kind: input, shape index: {}]
  %s6 = inlined_call_operand.<no memory space> [shape: f32[1,1], index: 6, kind: input, shape index: {}]
  %s7 = inlined_call_operand.hbm [shape: f32[1,8], index: 7, kind: output, shape index: {}]
  %s8 = sld [smem:[#allocation0]]
  $region38: #{tpu_custom_call.1} parent=0
    _
  %s10 = ssub.s32 1, %s8
  %s11 = scalar_select 0, %s10, %s8
  %v12 = vstv %s6
  %13 = vst [vmem:[#allocation2] sm:$0x1] %v12
  $region1: #{tpu_custom_call.1} parent=0
    #allocation3 [shape = 'u8[512]{0}', space=vmem, size = 0x400, scoped, tag = 'output window, operand 0, single buffered']
    #allocation4 [shape = 's32[1]{0}', space=sflag, size = 0x4, scoped, tag = 'scoped memory for tpu_custom_call.1']
    %14 = vsyncpa [#allocation4], 0
    // Predicated region
    $region2: #{tpu_custom_call.1} parent=1 // pred_check
      _
    $region3: #{tpu_custom_call.1} parent=1 // pred_check_branch
      %16 = sbr.rel (0) target = $region5
    $region4: #{tpu_custom_call.1} parent=1 // pred_region
      _
    $region5: #{tpu_custom_call.1} parent=1 // pred_fallthru
      _
    // Predicated region
    $region6: #{tpu_custom_call.1} parent=1 // pred_check
      _
    $region7: #{tpu_custom_call.1} parent=1 // pred_check_branch
      %18 = sbr.rel (0) target = $region9
    $region8: #{tpu_custom_call.1} parent=1 // pred_region
      _
    $region9: #{tpu_custom_call.1} parent=1 // pred_fallthru
      _
    // Predicated region
    $region10: #{tpu_custom_call.1} parent=1 // pred_check
      _
    $region11: #{tpu_custom_call.1} parent=1 // pred_check_branch
      %20 = sbr.rel (0) target = $region13
    $region12: #{tpu_custom_call.1} parent=1 // pred_region
      _
    $region13: #{tpu_custom_call.1} parent=1 // pred_fallthru
      _
    // Predicated region
    $region14: #{tpu_custom_call.1} parent=1 // pred_check
      _
    $region15: #{tpu_custom_call.1} parent=1 // pred_check_branch
      %22 = sbr.rel (0) target = $region17
    $region16: #{tpu_custom_call.1} parent=1 // pred_region
      _
    $region17: #{tpu_custom_call.1} parent=1 // pred_fallthru
      _
    // Predicated region
    $region18: #{tpu_custom_call.1} parent=1 // pred_check
      _
    $region19: #{tpu_custom_call.1} parent=1 // pred_check_branch
      %24 = sbr.rel (0) target = $region21
    $region20: #{tpu_custom_call.1} parent=1 // pred_region
      _
    $region21: #{tpu_custom_call.1} parent=1 // pred_fallthru
      _
    // Predicated region
    $region22: #{tpu_custom_call.1} parent=1 // pred_check
      _
    $region23: #{tpu_custom_call.1} parent=1 // pred_check_branch
      %26 = sbr.rel (0) target = $region25
    $region24: #{tpu_custom_call.1} parent=1 // pred_region
      _
    $region25: #{tpu_custom_call.1} parent=1 // pred_fallthru
      _
    // Predicated region
    $region26: #{tpu_custom_call.1} parent=1 // pred_check
      _
    $region27: #{tpu_custom_call.1} parent=1 // pred_check_branch
      %28 = sbr.rel (0) target = $region29
    $region28: #{tpu_custom_call.1} parent=1 // pred_region
      _
    $region29: #{tpu_custom_call.1} parent=1 // pred_fallthru
      _
    %v29 = vld [vmem:[%s1] sm:$0xff]
    %v30 = vld [vmem:[%s1 + $0x8] sm:$0xff]
    %v31 = vld [vmem:[%s1 + $0x10] sm:$0xff]
    %v32 = vld [vmem:[%s1 + $0x18] sm:$0xff]
    %v33 = vld [vmem:[%s0] sm:$0xff]
    %v34 = vld [vmem:[%s0 + $0x8] sm:$0xff]
    %v35 = vld [vmem:[%s0 + $0x10] sm:$0xff]
    %v36 = vld [vmem:[%s0 + $0x18] sm:$0xff]
    %v37 = vld [vmem:[%s0 + $0x20] sm:$0xff]
    %v38 = vld [vmem:[%s0 + $0x28] sm:$0xff]
    %v39 = vld [vmem:[%s0 + $0x30] sm:$0xff]
    %v40 = vld [vmem:[%s0 + $0x38] sm:$0xff]
    %v41 = vld [vmem:[%s0 + $0x40] sm:$0xff]
    %v42 = vld [vmem:[%s0 + $0x48] sm:$0xff]
    %v43 = vld [vmem:[%s0 + $0x50] sm:$0xff]
    %v44 = vld [vmem:[%s0 + $0x58] sm:$0xff]
    %v45 = vld [vmem:[%s0 + $0x60] sm:$0xff]
    %v46 = vld [vmem:[%s0 + $0x68] sm:$0xff]
    %v47 = vld [vmem:[%s0 + $0x70] sm:$0xff]
    %v48 = vld [vmem:[%s0 + $0x78] sm:$0xff]
    %v49 = vld [vmem:[%s2] sm:$0xff]
    %v50 = vld [vmem:[%s2 + $0x8] sm:$0xff]
    %v51 = vld [vmem:[%s2 + $0x10] sm:$0xff]
    %v52 = vld [vmem:[%s2 + $0x18] sm:$0xff]
    %54 = vset.pattern.permute.xlu0 0
    %55 = vperm.xlu0 %54, %v49
    %v56 = vpop.permute.xlu0 %55
    %59 = vset.pattern.permute.xlu0 0
    %60 = vperm.xlu0 %59, %v50
    %v61 = vpop.permute.xlu0 %60
    %64 = vset.pattern.permute.xlu0 0
    %65 = vperm.xlu0 %64, %v51
    %v66 = vpop.permute.xlu0 %65
    %69 = vset.pattern.permute.xlu0 0
    %70 = vperm.xlu0 %69, %v52
    %v71 = vpop.permute.xlu0 %70
    %vm73 = vcmask 261120
    %v75 = vsel %vm73, %v29, 0
    %v78 = vsel %vm73, %v30, 0
    %v81 = vsel %vm73, %v31, 0
    %v84 = vsel %vm73, %v32, 0
    %v87 = vsel %vm73, %v33, 0
    %v90 = vsel %vm73, %v34, 0
    %v93 = vsel %vm73, %v35, 0
    %v96 = vsel %vm73, %v36, 0
    %v99 = vsel %vm73, %v37, 0
    %v102 = vsel %vm73, %v38, 0
    %v105 = vsel %vm73, %v39, 0
    %v108 = vsel %vm73, %v40, 0
    %v111 = vsel %vm73, %v41, 0
    %v114 = vsel %vm73, %v42, 0
    %v117 = vsel %vm73, %v43, 0
    %v120 = vsel %vm73, %v44, 0
    %v123 = vsel %vm73, %v45, 0
    %v126 = vsel %vm73, %v46, 0
    %v129 = vsel %vm73, %v47, 0
    %v132 = vsel %vm73, %v48, 0
    %134 = vmatprep.subr.mxu0 0.0
    %v135 = vand.u32 %v87, 4294901760
    %136 = vmatpush1.xpose.msra.mxu0 %v135
    %137 = vmatprep.subr.mxu0 0.0
    %v138 = vand.u32 %v90, 4294901760
    %139 = vmatpush1.xpose.msra.mxu0 %v138
    %140 = vmatprep.subr.mxu0 0.0
    %v141 = vand.u32 %v93, 4294901760
    %142 = vmatpush1.xpose.msra.mxu0 %v141
    %143 = vmatprep.subr.mxu0 0.0
    %v144 = vand.u32 %v96, 4294901760
    %145 = vmatpush1.xpose.msra.mxu0 %v144
    %146 = vmatprep.subr.mxu0 0.0
    %v147 = vand.u32 %v99, 4294901760
    %148 = vmatpush1.xpose.msra.mxu0 %v147
    %149 = vmatprep.subr.mxu0 0.0
    %v150 = vand.u32 %v102, 4294901760
    %151 = vmatpush1.xpose.msra.mxu0 %v150
    %152 = vmatprep.subr.mxu0 0.0
    %v153 = vand.u32 %v105, 4294901760
    %154 = vmatpush1.xpose.msra.mxu0 %v153
    %155 = vmatprep.subr.mxu0 0.0
    %v156 = vand.u32 %v108, 4294901760
    %157 = vmatpush1.xpose.msra.mxu0 %v156
    %158 = vmatprep.subr.mxu0 0.0
    %v159 = vand.u32 %v111, 4294901760
    %160 = vmatpush1.xpose.msra.mxu0 %v159
    %161 = vmatprep.subr.mxu0 0.0
    %v162 = vand.u32 %v114, 4294901760
    %163 = vmatpush1.xpose.msra.mxu0 %v162
    %164 = vmatprep.subr.mxu0 0.0
    %v165 = vand.u32 %v117, 4294901760
    %166 = vmatpush1.xpose.msra.mxu0 %v165
    %167 = vmatprep.subr.mxu0 0.0
    %v168 = vand.u32 %v120, 4294901760
    %169 = vmatpush1.xpose.msra.mxu0 %v168
    %170 = vmatprep.subr.mxu0 0.0
    %v171 = vand.u32 %v123, 4294901760
    %172 = vmatpush1.xpose.msra.mxu0 %v171
    %173 = vmatprep.subr.mxu0 0.0
    %v174 = vand.u32 %v126, 4294901760
    %175 = vmatpush1.xpose.msra.mxu0 %v174
    %176 = vmatprep.subr.mxu0 0.0
    %v177 = vand.u32 %v129, 4294901760
    %178 = vmatpush1.xpose.msra.mxu0 %v177
    %179 = vmatprep.subr.mxu0 0.0
    %v180 = vand.u32 %v132, 4294901760
    %181 = vmatpush1.xpose.msra.mxu0 %v180
    %182 = vmatprep.subr.mxu0 0.0
    %183 = vmatpush1.xpose.msra.mxu0 0.0
    %184 = vmatprep.subr.mxu0 0.0
    %185 = vmatpush1.xpose.msra.mxu0 0.0
    %186 = vmatprep.subr.mxu0 0.0
    %187 = vmatpush1.xpose.msra.mxu0 0.0
    %188 = vmatprep.subr.mxu0 0.0
    %189 = vmatpush1.xpose.msra.mxu0 0.0
    %190 = vmatprep.subr.mxu0 0.0
    %191 = vmatpush1.xpose.msra.mxu0 0.0
    %192 = vmatprep.subr.mxu0 0.0
    %193 = vmatpush1.xpose.msra.mxu0 0.0
    %194 = vmatprep.subr.mxu0 0.0
    %195 = vmatpush1.xpose.msra.mxu0 0.0
    %196 = vmatprep.subr.mxu0 0.0
    %197 = vmatpush1.xpose.msra.mxu0 0.0
    %198 = vmatprep.subr.mxu0 0.0
    %199 = vmatpush1.xpose.msra.mxu0 0.0
    %200 = vmatprep.subr.mxu0 0.0
    %201 = vmatpush1.xpose.msra.mxu0 0.0
    %202 = vmatprep.subr.mxu0 0.0
    %203 = vmatpush1.xpose.msra.mxu0 0.0
    %204 = vmatprep.subr.mxu0 0.0
    %205 = vmatpush1.xpose.msra.mxu0 0.0
    %206 = vmatprep.subr.mxu0 0.0
    %207 = vmatpush1.xpose.msra.mxu0 0.0
    %208 = vmatprep.subr.mxu0 0.0
    %209 = vmatpush1.xpose.msra.mxu0 0.0
    %210 = vmatprep.subr.mxu0 0.0
    %211 = vmatpush1.xpose.msra.mxu0 0.0
    %212 = vmatprep.subr.mxu0 0.0
    %213 = vmatpush1.xpose.msra.mxu0 0.0
    %214 = vmatprep.mubr.f32.mxu0 0.0
    %v215 = vand.u32 %v75, 4294901760
    %v216 = vsub.f32 %v75, %v215
    %v217 = vand.u32 %v216, 4294901760
    %v218 = vsub.f32 %v216, %v217
    %v219 = vand.u32 %v218, 4294901760
    %220 = vmatmul.mubr.f32.gmra.mrb[0].mxu0 %v219
    %v221 = vpop.f32.mrb[0].mxu0
    %v222 = vadd.f32 %v56, %v221
    %v223 = vpop.f32.mrb[0].mxu0
    %224 = vmatprep.mubr.f32.mxu0 0.0
    %v225 = vand.u32 %v78, 4294901760
    %v226 = vsub.f32 %v78, %v225
    %v227 = vand.u32 %v226, 4294901760
    %v228 = vsub.f32 %v226, %v227
    %v229 = vand.u32 %v228, 4294901760
    %230 = vmatmul.mubr.f32.gmra.mrb[0].mxu0 %v229
    %v231 = vpop.f32.mrb[0].mxu0
    %v232 = vadd.f32 %v61, %v231
    %v233 = vpop.f32.mrb[0].mxu0
    %234 = vmatprep.mubr.f32.mxu0 0.0
    %v235 = vand.u32 %v81, 4294901760
    %v236 = vsub.f32 %v81, %v235
    %v237 = vand.u32 %v236, 4294901760
    %v238 = vsub.f32 %v236, %v237
    %v239 = vand.u32 %v238, 4294901760
    %240 = vmatmul.mubr.f32.gmra.mrb[0].mxu0 %v239
    %v241 = vpop.f32.mrb[0].mxu0
    %v242 = vadd.f32 %v66, %v241
    %v243 = vpop.f32.mrb[0].mxu0
    %244 = vmatprep.mubr.f32.mxu0 0.0
    %v245 = vand.u32 %v84, 4294901760
    %v246 = vsub.f32 %v84, %v245
    %v247 = vand.u32 %v246, 4294901760
    %v248 = vsub.f32 %v246, %v247
    %v249 = vand.u32 %v248, 4294901760
    %250 = vmatmul.mubr.f32.gmra.mrb[0].mxu0 %v249
    %v251 = vpop.f32.mrb[0].mxu0
    %v252 = vadd.f32 %v71, %v251
    %v253 = vpop.f32.mrb[0].mxu0
    %254 = vdwg.mxu0
    %255 = vmatprep.subr.mxu0 0.0
    %v256 = vand.u32 %v87, 4294901760
    %v257 = vsub.f32 %v87, %v256
    %v258 = vand.u32 %v257, 4294901760
    %v259 = vsub.f32 %v257, %v258
    %v260 = vand.u32 %v259, 4294901760
    %261 = vmatpush1.xpose.msra.mxu0 %v260
    %262 = vmatprep.subr.mxu0 0.0
    %v263 = vand.u32 %v90, 4294901760
    %v264 = vsub.f32 %v90, %v263
    %v265 = vand.u32 %v264, 4294901760
    %v266 = vsub.f32 %v264, %v265
    %v267 = vand.u32 %v266, 4294901760
    %268 = vmatpush1.xpose.msra.mxu0 %v267
    %269 = vmatprep.subr.mxu0 0.0
    %v270 = vand.u32 %v93, 4294901760
    %v271 = vsub.f32 %v93, %v270
    %v272 = vand.u32 %v271, 4294901760
    %v273 = vsub.f32 %v271, %v272
    %v274 = vand.u32 %v273, 4294901760
    %275 = vmatpush1.xpose.msra.mxu0 %v274
    %276 = vmatprep.subr.mxu0 0.0
    %v277 = vand.u32 %v96, 4294901760
    %v278 = vsub.f32 %v96, %v277
    %v279 = vand.u32 %v278, 4294901760
    %v280 = vsub.f32 %v278, %v279
    %v281 = vand.u32 %v280, 4294901760
    %282 = vmatpush1.xpose.msra.mxu0 %v281
    %283 = vmatprep.subr.mxu0 0.0
    %v284 = vand.u32 %v99, 4294901760
    %v285 = vsub.f32 %v99, %v284
    %v286 = vand.u32 %v285, 4294901760
    %v287 = vsub.f32 %v285, %v286
    %v288 = vand.u32 %v287, 4294901760
    %289 = vmatpush1.xpose.msra.mxu0 %v288
    %290 = vmatprep.subr.mxu0 0.0
    %v291 = vand.u32 %v102, 4294901760
    %v292 = vsub.f32 %v102, %v291
    %v293 = vand.u32 %v292, 4294901760
    %v294 = vsub.f32 %v292, %v293
    %v295 = vand.u32 %v294, 4294901760
    %296 = vmatpush1.xpose.msra.mxu0 %v295
    %297 = vmatprep.subr.mxu0 0.0
    %v298 = vand.u32 %v105, 4294901760
    %v299 = vsub.f32 %v105, %v298
    %v300 = vand.u32 %v299, 4294901760
    %v301 = vsub.f32 %v299, %v300
    %v302 = vand.u32 %v301, 4294901760
    %303 = vmatpush1.xpose.msra.mxu0 %v302
    %304 = vmatprep.subr.mxu0 0.0
    %v305 = vand.u32 %v108, 4294901760
    %v306 = vsub.f32 %v108, %v305
    %v307 = vand.u32 %v306, 4294901760
    %v308 = vsub.f32 %v306, %v307
    %v309 = vand.u32 %v308, 4294901760
    %310 = vmatpush1.xpose.msra.mxu0 %v309
    %311 = vmatprep.subr.mxu0 0.0
    %v312 = vand.u32 %v111, 4294901760
    %v313 = vsub.f32 %v111, %v312
    %v314 = vand.u32 %v313, 4294901760
    %v315 = vsub.f32 %v313, %v314
    %v316 = vand.u32 %v315, 4294901760
    %317 = vmatpush1.xpose.msra.mxu0 %v316
    %318 = vmatprep.subr.mxu0 0.0
    %v319 = vand.u32 %v114, 4294901760
    %v320 = vsub.f32 %v114, %v319
    %v321 = vand.u32 %v320, 4294901760
    %v322 = vsub.f32 %v320, %v321
    %v323 = vand.u32 %v322, 4294901760
    %324 = vmatpush1.xpose.msra.mxu0 %v323
    %325 = vmatprep.subr.mxu0 0.0
    %v326 = vand.u32 %v117, 4294901760
    %v327 = vsub.f32 %v117, %v326
    %v328 = vand.u32 %v327, 4294901760
    %v329 = vsub.f32 %v327, %v328
    %v330 = vand.u32 %v329, 4294901760
    %331 = vmatpush1.xpose.msra.mxu0 %v330
    %332 = vmatprep.subr.mxu0 0.0
    %v333 = vand.u32 %v120, 4294901760
    %v334 = vsub.f32 %v120, %v333
    %v335 = vand.u32 %v334, 4294901760
    %v336 = vsub.f32 %v334, %v335
    %v337 = vand.u32 %v336, 4294901760
    %338 = vmatpush1.xpose.msra.mxu0 %v337
    %339 = vmatprep.subr.mxu0 0.0
    %v340 = vand.u32 %v123, 4294901760
    %v341 = vsub.f32 %v123, %v340
    %v342 = vand.u32 %v341, 4294901760
    %v343 = vsub.f32 %v341, %v342
    %v344 = vand.u32 %v343, 4294901760
    %345 = vmatpush1.xpose.msra.mxu0 %v344
    %346 = vmatprep.subr.mxu0 0.0
    %v347 = vand.u32 %v126, 4294901760
    %v348 = vsub.f32 %v126, %v347
    %v349 = vand.u32 %v348, 4294901760
    %v350 = vsub.f32 %v348, %v349
    %v351 = vand.u32 %v350, 4294901760
    %352 = vmatpush1.xpose.msra.mxu0 %v351
    %353 = vmatprep.subr.mxu0 0.0
    %v354 = vand.u32 %v129, 4294901760
    %v355 = vsub.f32 %v129, %v354
    %v356 = vand.u32 %v355, 4294901760
    %v357 = vsub.f32 %v355, %v356
    %v358 = vand.u32 %v357, 4294901760
    %359 = vmatpush1.xpose.msra.mxu0 %v358
    %360 = vmatprep.subr.mxu0 0.0
    %v361 = vand.u32 %v132, 4294901760
    %v362 = vsub.f32 %v132, %v361
    %v363 = vand.u32 %v362, 4294901760
    %v364 = vsub.f32 %v362, %v363
    %v365 = vand.u32 %v364, 4294901760
    %366 = vmatpush1.xpose.msra.mxu0 %v365
    %367 = vmatprep.subr.mxu0 0.0
    %368 = vmatpush1.xpose.msra.mxu0 0.0
    %369 = vmatprep.subr.mxu0 0.0
    %370 = vmatpush1.xpose.msra.mxu0 0.0
    %371 = vmatprep.subr.mxu0 0.0
    %372 = vmatpush1.xpose.msra.mxu0 0.0
    %373 = vmatprep.subr.mxu0 0.0
    %374 = vmatpush1.xpose.msra.mxu0 0.0
    %375 = vmatprep.subr.mxu0 0.0
    %376 = vmatpush1.xpose.msra.mxu0 0.0
    %377 = vmatprep.subr.mxu0 0.0
    %378 = vmatpush1.xpose.msra.mxu0 0.0
    %379 = vmatprep.subr.mxu0 0.0
    %380 = vmatpush1.xpose.msra.mxu0 0.0
    %381 = vmatprep.subr.mxu0 0.0
    %382 = vmatpush1.xpose.msra.mxu0 0.0
    %383 = vmatprep.subr.mxu0 0.0
    %384 = vmatpush1.xpose.msra.mxu0 0.0
    %385 = vmatprep.subr.mxu0 0.0
    %386 = vmatpush1.xpose.msra.mxu0 0.0
    %387 = vmatprep.subr.mxu0 0.0
    %388 = vmatpush1.xpose.msra.mxu0 0.0
    %389 = vmatprep.subr.mxu0 0.0
    %390 = vmatpush1.xpose.msra.mxu0 0.0
    %391 = vmatprep.subr.mxu0 0.0
    %392 = vmatpush1.xpose.msra.mxu0 0.0
    %393 = vmatprep.subr.mxu0 0.0
    %394 = vmatpush1.xpose.msra.mxu0 0.0
    %395 = vmatprep.subr.mxu0 0.0
    %396 = vmatpush1.xpose.msra.mxu0 0.0
    %397 = vmatprep.subr.mxu0 0.0
    %398 = vmatpush1.xpose.msra.mxu0 0.0
    %399 = vmatprep.mubr.f32.mxu0 0.0
    %v400 = vand.u32 %v75, 4294901760
    %401 = vmatmul.mubr.f32.gmra.mrb[0].mxu0 %v400
    %v402 = vpop.f32.mrb[0].mxu0
    %v403 = vadd.f32 %v222, %v402
    %v404 = vpop.f32.mrb[0].mxu0
    %405 = vmatprep.mubr.f32.mxu0 0.0
    %v406 = vand.u32 %v78, 4294901760
    %407 = vmatmul.mubr.f32.gmra.mrb[0].mxu0 %v406
    %v408 = vpop.f32.mrb[0].mxu0
    %v409 = vadd.f32 %v232, %v408
    %v410 = vpop.f32.mrb[0].mxu0
    %411 = vmatprep.mubr.f32.mxu0 0.0
    %v412 = vand.u32 %v81, 4294901760
    %413 = vmatmul.mubr.f32.gmra.mrb[0].mxu0 %v412
    %v414 = vpop.f32.mrb[0].mxu0
    %v415 = vadd.f32 %v242, %v414
    %v416 = vpop.f32.mrb[0].mxu0
    %417 = vmatprep.mubr.f32.mxu0 0.0
    %v418 = vand.u32 %v84, 4294901760
    %419 = vmatmul.mubr.f32.gmra.mrb[0].mxu0 %v418
    %v420 = vpop.f32.mrb[0].mxu0
    %v421 = vadd.f32 %v252, %v420
    %v422 = vpop.f32.mrb[0].mxu0
    %423 = vdwg.mxu0
    %424 = vmatprep.subr.mxu0 0.0
    %v425 = vand.u32 %v87, 4294901760
    %v426 = vsub.f32 %v87, %v425
    %427 = vmatpush1.xpose.msra.mxu0 %v426
    %428 = vmatprep.subr.mxu0 0.0
    %v429 = vand.u32 %v90, 4294901760
    %v430 = vsub.f32 %v90, %v429
    %431 = vmatpush1.xpose.msra.mxu0 %v430
    %432 = vmatprep.subr.mxu0 0.0
    %v433 = vand.u32 %v93, 4294901760
    %v434 = vsub.f32 %v93, %v433
    %435 = vmatpush1.xpose.msra.mxu0 %v434
    %436 = vmatprep.subr.mxu0 0.0
    %v437 = vand.u32 %v96, 4294901760
    %v438 = vsub.f32 %v96, %v437
    %439 = vmatpush1.xpose.msra.mxu0 %v438
    %440 = vmatprep.subr.mxu0 0.0
    %v441 = vand.u32 %v99, 4294901760
    %v442 = vsub.f32 %v99, %v441
    %443 = vmatpush1.xpose.msra.mxu0 %v442
    %444 = vmatprep.subr.mxu0 0.0
    %v445 = vand.u32 %v102, 4294901760
    %v446 = vsub.f32 %v102, %v445
    %447 = vmatpush1.xpose.msra.mxu0 %v446
    %448 = vmatprep.subr.mxu0 0.0
    %v449 = vand.u32 %v105, 4294901760
    %v450 = vsub.f32 %v105, %v449
    %451 = vmatpush1.xpose.msra.mxu0 %v450
    %452 = vmatprep.subr.mxu0 0.0
    %v453 = vand.u32 %v108, 4294901760
    %v454 = vsub.f32 %v108, %v453
    %455 = vmatpush1.xpose.msra.mxu0 %v454
    %456 = vmatprep.subr.mxu0 0.0
    %v457 = vand.u32 %v111, 4294901760
    %v458 = vsub.f32 %v111, %v457
    %459 = vmatpush1.xpose.msra.mxu0 %v458
    %460 = vmatprep.subr.mxu0 0.0
    %v461 = vand.u32 %v114, 4294901760
    %v462 = vsub.f32 %v114, %v461
    %463 = vmatpush1.xpose.msra.mxu0 %v462
    %464 = vmatprep.subr.mxu0 0.0
    %v465 = vand.u32 %v117, 4294901760
    %v466 = vsub.f32 %v117, %v465
    %467 = vmatpush1.xpose.msra.mxu0 %v466
    %468 = vmatprep.subr.mxu0 0.0
    %v469 = vand.u32 %v120, 4294901760
    %v470 = vsub.f32 %v120, %v469
    %471 = vmatpush1.xpose.msra.mxu0 %v470
    %472 = vmatprep.subr.mxu0 0.0
    %v473 = vand.u32 %v123, 4294901760
    %v474 = vsub.f32 %v123, %v473
    %475 = vmatpush1.xpose.msra.mxu0 %v474
    %476 = vmatprep.subr.mxu0 0.0
    %v477 = vand.u32 %v126, 4294901760
    %v478 = vsub.f32 %v126, %v477
    %479 = vmatpush1.xpose.msra.mxu0 %v478
    %480 = vmatprep.subr.mxu0 0.0
    %v481 = vand.u32 %v129, 4294901760
    %v482 = vsub.f32 %v129, %v481
    %483 = vmatpush1.xpose.msra.mxu0 %v482
    %484 = vmatprep.subr.mxu0 0.0
    %v485 = vand.u32 %v132, 4294901760
    %v486 = vsub.f32 %v132, %v485
    %487 = vmatpush1.xpose.msra.mxu0 %v486
    %488 = vmatprep.subr.mxu0 0.0
    %489 = vmatpush1.xpose.msra.mxu0 0.0
    %490 = vmatprep.subr.mxu0 0.0
    %491 = vmatpush1.xpose.msra.mxu0 0.0
    %492 = vmatprep.subr.mxu0 0.0
    %493 = vmatpush1.xpose.msra.mxu0 0.0
    %494 = vmatprep.subr.mxu0 0.0
    %495 = vmatpush1.xpose.msra.mxu0 0.0
    %496 = vmatprep.subr.mxu0 0.0
    %497 = vmatpush1.xpose.msra.mxu0 0.0
    %498 = vmatprep.subr.mxu0 0.0
    %499 = vmatpush1.xpose.msra.mxu0 0.0
    %500 = vmatprep.subr.mxu0 0.0
    %501 = vmatpush1.xpose.msra.mxu0 0.0
    %502 = vmatprep.subr.mxu0 0.0
    %503 = vmatpush1.xpose.msra.mxu0 0.0
    %504 = vmatprep.subr.mxu0 0.0
    %505 = vmatpush1.xpose.msra.mxu0 0.0
    %506 = vmatprep.subr.mxu0 0.0
    %507 = vmatpush1.xpose.msra.mxu0 0.0
    %508 = vmatprep.subr.mxu0 0.0
    %509 = vmatpush1.xpose.msra.mxu0 0.0
    %510 = vmatprep.subr.mxu0 0.0
    %511 = vmatpush1.xpose.msra.mxu0 0.0
    %512 = vmatprep.subr.mxu0 0.0
    %513 = vmatpush1.xpose.msra.mxu0 0.0
    %514 = vmatprep.subr.mxu0 0.0
    %515 = vmatpush1.xpose.msra.mxu0 0.0
    %516 = vmatprep.subr.mxu0 0.0
    %517 = vmatpush1.xpose.msra.mxu0 0.0
    %518 = vmatprep.subr.mxu0 0.0
    %519 = vmatpush1.xpose.msra.mxu0 0.0
    %520 = vmatprep.mubr.f32.mxu0 0.0
    %v521 = vand.u32 %v75, 4294901760
    %v522 = vsub.f32 %v75, %v521
    %523 = vmatmul.mubr.f32.gmra.mrb[0].mxu0 %v522
    %v524 = vpop.f32.mrb[0].mxu0
    %v525 = vadd.f32 %v403, %v524
    %v526 = vpop.f32.mrb[0].mxu0
    %527 = vmatprep.mubr.f32.mxu0 0.0
    %v528 = vand.u32 %v78, 4294901760
    %v529 = vsub.f32 %v78, %v528
    %530 = vmatmul.mubr.f32.gmra.mrb[0].mxu0 %v529
    %v531 = vpop.f32.mrb[0].mxu0
    %v532 = vadd.f32 %v409, %v531
    %v533 = vpop.f32.mrb[0].mxu0
    %534 = vmatprep.mubr.f32.mxu0 0.0
    %v535 = vand.u32 %v81, 4294901760
    %v536 = vsub.f32 %v81, %v535
    %537 = vmatmul.mubr.f32.gmra.mrb[0].mxu0 %v536
    %v538 = vpop.f32.mrb[0].mxu0
    %v539 = vadd.f32 %v415, %v538
    %v540 = vpop.f32.mrb[0].mxu0
    %541 = vmatprep.mubr.f32.mxu0 0.0
    %v542 = vand.u32 %v84, 4294901760
    %v543 = vsub.f32 %v84, %v542
    %544 = vmatmul.mubr.f32.gmra.mrb[0].mxu0 %v543
    %v545 = vpop.f32.mrb[0].mxu0
    %v546 = vadd.f32 %v421, %v545
    %v547 = vpop.f32.mrb[0].mxu0
    %548 = vdwg.mxu0
    %549 = vmatprep.subr.mxu0 0.0
    %v550 = vand.u32 %v87, 4294901760
    %551 = vmatpush1.xpose.msra.mxu0 %v550
    %552 = vmatprep.subr.mxu0 0.0
    %v553 = vand.u32 %v90, 4294901760
    %554 = vmatpush1.xpose.msra.mxu0 %v553
    %555 = vmatprep.subr.mxu0 0.0
    %v556 = vand.u32 %v93, 4294901760
    %557 = vmatpush1.xpose.msra.mxu0 %v556
    %558 = vmatprep.subr.mxu0 0.0
    %v559 = vand.u32 %v96, 4294901760
    %560 = vmatpush1.xpose.msra.mxu0 %v559
    %561 = vmatprep.subr.mxu0 0.0
    %v562 = vand.u32 %v99, 4294901760
    %563 = vmatpush1.xpose.msra.mxu0 %v562
    %564 = vmatprep.subr.mxu0 0.0
    %v565 = vand.u32 %v102, 4294901760
    %566 = vmatpush1.xpose.msra.mxu0 %v565
    %567 = vmatprep.subr.mxu0 0.0
    %v568 = vand.u32 %v105, 4294901760
    %569 = vmatpush1.xpose.msra.mxu0 %v568
    %570 = vmatprep.subr.mxu0 0.0
    %v571 = vand.u32 %v108, 4294901760
    %572 = vmatpush1.xpose.msra.mxu0 %v571
    %573 = vmatprep.subr.mxu0 0.0
    %v574 = vand.u32 %v111, 4294901760
    %575 = vmatpush1.xpose.msra.mxu0 %v574
    %576 = vmatprep.subr.mxu0 0.0
    %v577 = vand.u32 %v114, 4294901760
    %578 = vmatpush1.xpose.msra.mxu0 %v577
    %579 = vmatprep.subr.mxu0 0.0
    %v580 = vand.u32 %v117, 4294901760
    %581 = vmatpush1.xpose.msra.mxu0 %v580
    %582 = vmatprep.subr.mxu0 0.0
    %v583 = vand.u32 %v120, 4294901760
    %584 = vmatpush1.xpose.msra.mxu0 %v583
    %585 = vmatprep.subr.mxu0 0.0
    %v586 = vand.u32 %v123, 4294901760
    %587 = vmatpush1.xpose.msra.mxu0 %v586
    %588 = vmatprep.subr.mxu0 0.0
    %v589 = vand.u32 %v126, 4294901760
    %590 = vmatpush1.xpose.msra.mxu0 %v589
    %591 = vmatprep.subr.mxu0 0.0
    %v592 = vand.u32 %v129, 4294901760
    %593 = vmatpush1.xpose.msra.mxu0 %v592
    %594 = vmatprep.subr.mxu0 0.0
    %v595 = vand.u32 %v132, 4294901760
    %596 = vmatpush1.xpose.msra.mxu0 %v595
    %597 = vmatprep.subr.mxu0 0.0
    %598 = vmatpush1.xpose.msra.mxu0 0.0
    %599 = vmatprep.subr.mxu0 0.0
    %600 = vmatpush1.xpose.msra.mxu0 0.0
    %601 = vmatprep.subr.mxu0 0.0
    %602 = vmatpush1.xpose.msra.mxu0 0.0
    %603 = vmatprep.subr.mxu0 0.0
    %604 = vmatpush1.xpose.msra.mxu0 0.0
    %605 = vmatprep.subr.mxu0 0.0
    %606 = vmatpush1.xpose.msra.mxu0 0.0
    %607 = vmatprep.subr.mxu0 0.0
    %608 = vmatpush1.xpose.msra.mxu0 0.0
    %609 = vmatprep.subr.mxu0 0.0
    %610 = vmatpush1.xpose.msra.mxu0 0.0
    %611 = vmatprep.subr.mxu0 0.0
    %612 = vmatpush1.xpose.msra.mxu0 0.0
    %613 = vmatprep.subr.mxu0 0.0
    %614 = vmatpush1.xpose.msra.mxu0 0.0
    %615 = vmatprep.subr.mxu0 0.0
    %616 = vmatpush1.xpose.msra.mxu0 0.0
    %617 = vmatprep.subr.mxu0 0.0
    %618 = vmatpush1.xpose.msra.mxu0 0.0
    %619 = vmatprep.subr.mxu0 0.0
    %620 = vmatpush1.xpose.msra.mxu0 0.0
    %621 = vmatprep.subr.mxu0 0.0
    %622 = vmatpush1.xpose.msra.mxu0 0.0
    %623 = vmatprep.subr.mxu0 0.0
    %624 = vmatpush1.xpose.msra.mxu0 0.0
    %625 = vmatprep.subr.mxu0 0.0
    %626 = vmatpush1.xpose.msra.mxu0 0.0
    %627 = vmatprep.subr.mxu0 0.0
    %628 = vmatpush1.xpose.msra.mxu0 0.0
    %629 = vmatprep.mubr.f32.mxu0 0.0
    %v630 = vand.u32 %v75, 4294901760
    %v631 = vsub.f32 %v75, %v630
    %v632 = vand.u32 %v631, 4294901760
    %633 = vmatmul.mubr.f32.gmra.mrb[0].mxu0 %v632
    %v634 = vpop.f32.mrb[0].mxu0
    %v635 = vadd.f32 %v525, %v634
    %v636 = vpop.f32.mrb[0].mxu0
    %637 = vmatprep.mubr.f32.mxu0 0.0
    %v638 = vand.u32 %v78, 4294901760
    %v639 = vsub.f32 %v78, %v638
    %v640 = vand.u32 %v639, 4294901760
    %641 = vmatmul.mubr.f32.gmra.mrb[0].mxu0 %v640
    %v642 = vpop.f32.mrb[0].mxu0
    %v643 = vadd.f32 %v532, %v642
    %v644 = vpop.f32.mrb[0].mxu0
    %645 = vmatprep.mubr.f32.mxu0 0.0
    %v646 = vand.u32 %v81, 4294901760
    %v647 = vsub.f32 %v81, %v646
    %v648 = vand.u32 %v647, 4294901760
    %649 = vmatmul.mubr.f32.gmra.mrb[0].mxu0 %v648
    %v650 = vpop.f32.mrb[0].mxu0
    %v651 = vadd.f32 %v539, %v650
    %v652 = vpop.f32.mrb[0].mxu0
    %653 = vmatprep.mubr.f32.mxu0 0.0
    %v654 = vand.u32 %v84, 4294901760
    %v655 = vsub.f32 %v84, %v654
    %v656 = vand.u32 %v655, 4294901760
    %657 = vmatmul.mubr.f32.gmra.mrb[0].mxu0 %v656
    %v658 = vpop.f32.mrb[0].mxu0
    %v659 = vadd.f32 %v546, %v658
    %v660 = vpop.f32.mrb[0].mxu0
    %661 = vdwg.mxu0
    %662 = vmatprep.subr.mxu0 0.0
    %v663 = vand.u32 %v87, 4294901760
    %v664 = vsub.f32 %v87, %v663
    %v665 = vand.u32 %v664, 4294901760
    %666 = vmatpush1.xpose.msra.mxu0 %v665
    %667 = vmatprep.subr.mxu0 0.0
    %v668 = vand.u32 %v90, 4294901760
    %v669 = vsub.f32 %v90, %v668
    %v670 = vand.u32 %v669, 4294901760
    %671 = vmatpush1.xpose.msra.mxu0 %v670
    %672 = vmatprep.subr.mxu0 0.0
    %v673 = vand.u32 %v93, 4294901760
    %v674 = vsub.f32 %v93, %v673
    %v675 = vand.u32 %v674, 4294901760
    %676 = vmatpush1.xpose.msra.mxu0 %v675
    %677 = vmatprep.subr.mxu0 0.0
    %v678 = vand.u32 %v96, 4294901760
    %v679 = vsub.f32 %v96, %v678
    %v680 = vand.u32 %v679, 4294901760
    %681 = vmatpush1.xpose.msra.mxu0 %v680
    %682 = vmatprep.subr.mxu0 0.0
    %v683 = vand.u32 %v99, 4294901760
    %v684 = vsub.f32 %v99, %v683
    %v685 = vand.u32 %v684, 4294901760
    %686 = vmatpush1.xpose.msra.mxu0 %v685
    %687 = vmatprep.subr.mxu0 0.0
    %v688 = vand.u32 %v102, 4294901760
    %v689 = vsub.f32 %v102, %v688
    %v690 = vand.u32 %v689, 4294901760
    %691 = vmatpush1.xpose.msra.mxu0 %v690
    %692 = vmatprep.subr.mxu0 0.0
    %v693 = vand.u32 %v105, 4294901760
    %v694 = vsub.f32 %v105, %v693
    %v695 = vand.u32 %v694, 4294901760
    %696 = vmatpush1.xpose.msra.mxu0 %v695
    %697 = vmatprep.subr.mxu0 0.0
    %v698 = vand.u32 %v108, 4294901760
    %v699 = vsub.f32 %v108, %v698
    %v700 = vand.u32 %v699, 4294901760
    %701 = vmatpush1.xpose.msra.mxu0 %v700
    %702 = vmatprep.subr.mxu0 0.0
    %v703 = vand.u32 %v111, 4294901760
    %v704 = vsub.f32 %v111, %v703
    %v705 = vand.u32 %v704, 4294901760
    %706 = vmatpush1.xpose.msra.mxu0 %v705
    %707 = vmatprep.subr.mxu0 0.0
    %v708 = vand.u32 %v114, 4294901760
    %v709 = vsub.f32 %v114, %v708
    %v710 = vand.u32 %v709, 4294901760
    %711 = vmatpush1.xpose.msra.mxu0 %v710
    %712 = vmatprep.subr.mxu0 0.0
    %v713 = vand.u32 %v117, 4294901760
    %v714 = vsub.f32 %v117, %v713
    %v715 = vand.u32 %v714, 4294901760
    %716 = vmatpush1.xpose.msra.mxu0 %v715
    %717 = vmatprep.subr.mxu0 0.0
    %v718 = vand.u32 %v120, 4294901760
    %v719 = vsub.f32 %v120, %v718
    %v720 = vand.u32 %v719, 4294901760
    %721 = vmatpush1.xpose.msra.mxu0 %v720
    %722 = vmatprep.subr.mxu0 0.0
    %v723 = vand.u32 %v123, 4294901760
    %v724 = vsub.f32 %v123, %v723
    %v725 = vand.u32 %v724, 4294901760
    %726 = vmatpush1.xpose.msra.mxu0 %v725
    %727 = vmatprep.subr.mxu0 0.0
    %v728 = vand.u32 %v126, 4294901760
    %v729 = vsub.f32 %v126, %v728
    %v730 = vand.u32 %v729, 4294901760
    %731 = vmatpush1.xpose.msra.mxu0 %v730
    %732 = vmatprep.subr.mxu0 0.0
    %v733 = vand.u32 %v129, 4294901760
    %v734 = vsub.f32 %v129, %v733
    %v735 = vand.u32 %v734, 4294901760
    %736 = vmatpush1.xpose.msra.mxu0 %v735
    %737 = vmatprep.subr.mxu0 0.0
    %v738 = vand.u32 %v132, 4294901760
    %v739 = vsub.f32 %v132, %v738
    %v740 = vand.u32 %v739, 4294901760
    %741 = vmatpush1.xpose.msra.mxu0 %v740
    %742 = vmatprep.subr.mxu0 0.0
    %743 = vmatpush1.xpose.msra.mxu0 0.0
    %744 = vmatprep.subr.mxu0 0.0
    %745 = vmatpush1.xpose.msra.mxu0 0.0
    %746 = vmatprep.subr.mxu0 0.0
    %747 = vmatpush1.xpose.msra.mxu0 0.0
    %748 = vmatprep.subr.mxu0 0.0
    %749 = vmatpush1.xpose.msra.mxu0 0.0
    %750 = vmatprep.subr.mxu0 0.0
    %751 = vmatpush1.xpose.msra.mxu0 0.0
    %752 = vmatprep.subr.mxu0 0.0
    %753 = vmatpush1.xpose.msra.mxu0 0.0
    %754 = vmatprep.subr.mxu0 0.0
    %755 = vmatpush1.xpose.msra.mxu0 0.0
    %756 = vmatprep.subr.mxu0 0.0
    %757 = vmatpush1.xpose.msra.mxu0 0.0
    %758 = vmatprep.subr.mxu0 0.0
    %759 = vmatpush1.xpose.msra.mxu0 0.0
    %760 = vmatprep.subr.mxu0 0.0
    %761 = vmatpush1.xpose.msra.mxu0 0.0
    %762 = vmatprep.subr.mxu0 0.0
    %763 = vmatpush1.xpose.msra.mxu0 0.0
    %764 = vmatprep.subr.mxu0 0.0
    %765 = vmatpush1.xpose.msra.mxu0 0.0
    %766 = vmatprep.subr.mxu0 0.0
    %767 = vmatpush1.xpose.msra.mxu0 0.0
    %768 = vmatprep.subr.mxu0 0.0
    %769 = vmatpush1.xpose.msra.mxu0 0.0
    %770 = vmatprep.subr.mxu0 0.0
    %771 = vmatpush1.xpose.msra.mxu0 0.0
    %772 = vmatprep.subr.mxu0 0.0
    %773 = vmatpush1.xpose.msra.mxu0 0.0
    %774 = vmatprep.mubr.f32.mxu0 0.0
    %v775 = vand.u32 %v75, 4294901760
    %776 = vmatmul.mubr.f32.gmra.mrb[0].mxu0 %v775
    %v777 = vpop.f32.mrb[0].mxu0
    %v778 = vadd.f32 %v635, %v777
    %v779 = vpop.f32.mrb[0].mxu0
    %780 = vmatprep.mubr.f32.mxu0 0.0
    %v781 = vand.u32 %v78, 4294901760
    %782 = vmatmul.mubr.f32.gmra.mrb[0].mxu0 %v781
    %v783 = vpop.f32.mrb[0].mxu0
    %v784 = vadd.f32 %v643, %v783
    %v785 = vpop.f32.mrb[0].mxu0
    %786 = vmatprep.mubr.f32.mxu0 0.0
    %v787 = vand.u32 %v81, 4294901760
    %788 = vmatmul.mubr.f32.gmra.mrb[0].mxu0 %v787
    %v789 = vpop.f32.mrb[0].mxu0
    %v790 = vadd.f32 %v651, %v789
    %v791 = vpop.f32.mrb[0].mxu0
    %792 = vmatprep.mubr.f32.mxu0 0.0
    %v793 = vand.u32 %v84, 4294901760
    %794 = vmatmul.mubr.f32.gmra.mrb[0].mxu0 %v793
    %v795 = vpop.f32.mrb[0].mxu0
    %v796 = vadd.f32 %v659, %v795
    %v797 = vpop.f32.mrb[0].mxu0
    %798 = vdwg.mxu0
    %799 = vmatprep.subr.mxu0 0.0
    %v800 = vand.u32 %v87, 4294901760
    %801 = vmatpush1.xpose.msra.mxu0 %v800
    %802 = vmatprep.subr.mxu0 0.0
    %v803 = vand.u32 %v90, 4294901760
    %804 = vmatpush1.xpose.msra.mxu0 %v803
    %805 = vmatprep.subr.mxu0 0.0
    %v806 = vand.u32 %v93, 4294901760
    %807 = vmatpush1.xpose.msra.mxu0 %v806
    %808 = vmatprep.subr.mxu0 0.0
    %v809 = vand.u32 %v96, 4294901760
    %810 = vmatpush1.xpose.msra.mxu0 %v809
    %811 = vmatprep.subr.mxu0 0.0
    %v812 = vand.u32 %v99, 4294901760
    %813 = vmatpush1.xpose.msra.mxu0 %v812
    %814 = vmatprep.subr.mxu0 0.0
    %v815 = vand.u32 %v102, 4294901760
    %816 = vmatpush1.xpose.msra.mxu0 %v815
    %817 = vmatprep.subr.mxu0 0.0
    %v818 = vand.u32 %v105, 4294901760
    %819 = vmatpush1.xpose.msra.mxu0 %v818
    %820 = vmatprep.subr.mxu0 0.0
    %v821 = vand.u32 %v108, 4294901760
    %822 = vmatpush1.xpose.msra.mxu0 %v821
    %823 = vmatprep.subr.mxu0 0.0
    %v824 = vand.u32 %v111, 4294901760
    %825 = vmatpush1.xpose.msra.mxu0 %v824
    %826 = vmatprep.subr.mxu0 0.0
    %v827 = vand.u32 %v114, 4294901760
    %828 = vmatpush1.xpose.msra.mxu0 %v827
    %829 = vmatprep.subr.mxu0 0.0
    %v830 = vand.u32 %v117, 4294901760
    %831 = vmatpush1.xpose.msra.mxu0 %v830
    %832 = vmatprep.subr.mxu0 0.0
    %v833 = vand.u32 %v120, 4294901760
    %834 = vmatpush1.xpose.msra.mxu0 %v833
    %835 = vmatprep.subr.mxu0 0.0
    %v836 = vand.u32 %v123, 4294901760
    %837 = vmatpush1.xpose.msra.mxu0 %v836
    %838 = vmatprep.subr.mxu0 0.0
    %v839 = vand.u32 %v126, 4294901760
    %840 = vmatpush1.xpose.msra.mxu0 %v839
    %841 = vmatprep.subr.mxu0 0.0
    %v842 = vand.u32 %v129, 4294901760
    %843 = vmatpush1.xpose.msra.mxu0 %v842
    %844 = vmatprep.subr.mxu0 0.0
    %v845 = vand.u32 %v132, 4294901760
    %846 = vmatpush1.xpose.msra.mxu0 %v845
    %847 = vmatprep.subr.mxu0 0.0
    %848 = vmatpush1.xpose.msra.mxu0 0.0
    %849 = vmatprep.subr.mxu0 0.0
    %850 = vmatpush1.xpose.msra.mxu0 0.0
    %851 = vmatprep.subr.mxu0 0.0
    %852 = vmatpush1.xpose.msra.mxu0 0.0
    %853 = vmatprep.subr.mxu0 0.0
    %854 = vmatpush1.xpose.msra.mxu0 0.0
    %855 = vmatprep.subr.mxu0 0.0
    %856 = vmatpush1.xpose.msra.mxu0 0.0
    %857 = vmatprep.subr.mxu0 0.0
    %858 = vmatpush1.xpose.msra.mxu0 0.0
    %859 = vmatprep.subr.mxu0 0.0
    %860 = vmatpush1.xpose.msra.mxu0 0.0
    %861 = vmatprep.subr.mxu0 0.0
    %862 = vmatpush1.xpose.msra.mxu0 0.0
    %863 = vmatprep.subr.mxu0 0.0
    %864 = vmatpush1.xpose.msra.mxu0 0.0
    %865 = vmatprep.subr.mxu0 0.0
    %866 = vmatpush1.xpose.msra.mxu0 0.0
    %867 = vmatprep.subr.mxu0 0.0
    %868 = vmatpush1.xpose.msra.mxu0 0.0
    %869 = vmatprep.subr.mxu0 0.0
    %870 = vmatpush1.xpose.msra.mxu0 0.0
    %871 = vmatprep.subr.mxu0 0.0
    %872 = vmatpush1.xpose.msra.mxu0 0.0
    %873 = vmatprep.subr.mxu0 0.0
    %874 = vmatpush1.xpose.msra.mxu0 0.0
    %875 = vmatprep.subr.mxu0 0.0
    %876 = vmatpush1.xpose.msra.mxu0 0.0
    %877 = vmatprep.subr.mxu0 0.0
    %878 = vmatpush1.xpose.msra.mxu0 0.0
    %879 = vmatprep.mubr.f32.mxu0 0.0
    %v880 = vand.u32 %v75, 4294901760
    %881 = vmatmul.mubr.f32.gmra.mrb[0].mxu0 %v880
    %v882 = vpop.f32.mrb[0].mxu0
    %v883 = vadd.f32 %v778, %v882
    %v884 = vpop.f32.mrb[0].mxu0
    %885 = vmatprep.mubr.f32.mxu0 0.0
    %v886 = vand.u32 %v78, 4294901760
    %887 = vmatmul.mubr.f32.gmra.mrb[0].mxu0 %v886
    %v888 = vpop.f32.mrb[0].mxu0
    %v889 = vadd.f32 %v784, %v888
    %v890 = vpop.f32.mrb[0].mxu0
    %891 = vmatprep.mubr.f32.mxu0 0.0
    %v892 = vand.u32 %v81, 4294901760
    %893 = vmatmul.mubr.f32.gmra.mrb[0].mxu0 %v892
    %v894 = vpop.f32.mrb[0].mxu0
    %v895 = vadd.f32 %v790, %v894
    %v896 = vpop.f32.mrb[0].mxu0
    %897 = vmatprep.mubr.f32.mxu0 0.0
    %v898 = vand.u32 %v84, 4294901760
    %899 = vmatmul.mubr.f32.gmra.mrb[0].mxu0 %v898
    %v900 = vpop.f32.mrb[0].mxu0
    %v901 = vadd.f32 %v796, %v900
    %v902 = vpop.f32.mrb[0].mxu0
    %903 = vdwg.mxu0
    %vm904 = vcmp.gt.f32.partialorder %v883, 0.0
    %vm905 = vcmp.gt.f32.partialorder %v889, 0.0
    %vm906 = vcmp.gt.f32.partialorder %v895, 0.0
    %vm907 = vcmp.gt.f32.partialorder %v901, 0.0
    %v908 = vmin.f32 %v883, 0.0
    %v909 = vmin.f32 %v889, 0.0
    %v910 = vmin.f32 %v895, 0.0
    %v911 = vmin.f32 %v901, 0.0
    %v912 = vmul.f32 %v908, 1.442695
    %v913 = vpow.pop %v912
    %v914 = vmul.f32 %v909, 1.442695
    %v915 = vpow.pop %v914
    %v916 = vmul.f32 %v910, 1.442695
    %v917 = vpow.pop %v916
    %v918 = vmul.f32 %v911, 1.442695
    %v919 = vpow.pop %v918
    %v920 = vsub.f32 %v913, 1.0
    %v921 = vsub.f32 %v915, 1.0
    %v922 = vsub.f32 %v917, 1.0
    %v923 = vsub.f32 %v919, 1.0
    %v924 = vsel %vm904, %v883, %v920
    %v925 = vsel %vm905, %v889, %v921
    %v926 = vsel %vm906, %v895, %v922
    %v927 = vsel %vm907, %v901, %v923
    %v928 = vld [vmem:[%s3] sm:$0xff]
    %v929 = vld [vmem:[%s3 + $0x8] sm:$0xff]
    %v930 = vld [vmem:[%s4] sm:$0xff]
    %v931 = vld [vmem:[%s4 + $0x8] sm:$0xff]
    %933 = vset.pattern.permute.xlu0 0
    %934 = vperm.xlu0 %933, %v930
    %v935 = vpop.permute.xlu0 %934
    %938 = vset.pattern.permute.xlu0 0
    %939 = vperm.xlu0 %938, %v931
    %v940 = vpop.permute.xlu0 %939
    %v943 = vsel %vm73, %v928, 0
    %v946 = vsel %vm73, %v929, 0
    %948 = vmatprep.subr.mxu0 0.0
    %v949 = vand.u32 %v924, 4294901760
    %950 = vmatpush1.msra.mxu0 %v949
    %951 = vmatprep.subr.mxu0 0.0
    %v952 = vand.u32 %v925, 4294901760
    %953 = vmatpush1.msra.mxu0 %v952
    %954 = vmatprep.subr.mxu0 0.0
    %v955 = vand.u32 %v926, 4294901760
    %956 = vmatpush1.msra.mxu0 %v955
    %957 = vmatprep.subr.mxu0 0.0
    %v958 = vand.u32 %v927, 4294901760
    %959 = vmatpush1.msra.mxu0 %v958
    %960 = vmatprep.subr.mxu0 0.0
    %961 = vmatpush1.msra.mxu0 0.0
    %962 = vmatprep.subr.mxu0 0.0
    %963 = vmatpush1.msra.mxu0 0.0
    %964 = vmatprep.subr.mxu0 0.0
    %965 = vmatpush1.msra.mxu0 0.0
    %966 = vmatprep.subr.mxu0 0.0
    %967 = vmatpush1.msra.mxu0 0.0
    %968 = vmatprep.subr.mxu0 0.0
    %969 = vmatpush1.msra.mxu0 0.0
    %970 = vmatprep.subr.mxu0 0.0
    %971 = vmatpush1.msra.mxu0 0.0
    %972 = vmatprep.subr.mxu0 0.0
    %973 = vmatpush1.msra.mxu0 0.0
    %974 = vmatprep.subr.mxu0 0.0
    %975 = vmatpush1.msra.mxu0 0.0
    %976 = vmatprep.subr.mxu0 0.0
    %977 = vmatpush1.msra.mxu0 0.0
    %978 = vmatprep.subr.mxu0 0.0
    %979 = vmatpush1.msra.mxu0 0.0
    %980 = vmatprep.subr.mxu0 0.0
    %981 = vmatpush1.msra.mxu0 0.0
    %982 = vmatprep.subr.mxu0 0.0
    %983 = vmatpush1.msra.mxu0 0.0
    %984 = vmatprep.subr.mxu0 0.0
    %985 = vmatpush1.msra.mxu0 0.0
    %986 = vmatprep.subr.mxu0 0.0
    %987 = vmatpush1.msra.mxu0 0.0
    %988 = vmatprep.subr.mxu0 0.0
    %989 = vmatpush1.msra.mxu0 0.0
    %990 = vmatprep.subr.mxu0 0.0
    %991 = vmatpush1.msra.mxu0 0.0
    %992 = vmatprep.subr.mxu0 0.0
    %993 = vmatpush1.msra.mxu0 0.0
    %994 = vmatprep.subr.mxu0 0.0
    %995 = vmatpush1.msra.mxu0 0.0
    %996 = vmatprep.subr.mxu0 0.0
    %997 = vmatpush1.msra.mxu0 0.0
    %998 = vmatprep.subr.mxu0 0.0
    %999 = vmatpush1.msra.mxu0 0.0
    %1000 = vmatprep.subr.mxu0 0.0
    %1001 = vmatpush1.msra.mxu0 0.0
    %1002 = vmatprep.subr.mxu0 0.0
    %1003 = vmatpush1.msra.mxu0 0.0
    %1004 = vmatprep.subr.mxu0 0.0
    %1005 = vmatpush1.msra.mxu0 0.0
    %1006 = vmatprep.subr.mxu0 0.0
    %1007 = vmatpush1.msra.mxu0 0.0
    %1008 = vmatprep.subr.mxu0 0.0
    %1009 = vmatpush1.msra.mxu0 0.0
    %1010 = vmatprep.subr.mxu0 0.0
    %1011 = vmatpush1.msra.mxu0 0.0
    %1012 = vmatprep.subr.mxu0 0.0
    %1013 = vmatpush1.msra.mxu0 0.0
    %1014 = vmatprep.subr.mxu0 0.0
    %1015 = vmatpush1.msra.mxu0 0.0
    %1016 = vmatprep.mubr.f32.mxu0 0.0
    %v1017 = vand.u32 %v943, 4294901760
    %v1018 = vsub.f32 %v943, %v1017
    %v1019 = vand.u32 %v1018, 4294901760
    %v1020 = vsub.f32 %v1018, %v1019
    %v1021 = vand.u32 %v1020, 4294901760
    %1022 = vmatmul.mubr.f32.gmra.mrb[0].mxu0 %v1021
    %v1023 = vpop.f32.mrb[0].mxu0
    %v1024 = vadd.f32 %v935, %v1023
    %v1025 = vpop.f32.mrb[0].mxu0
    %1026 = vmatprep.mubr.f32.mxu0 0.0
    %v1027 = vand.u32 %v946, 4294901760
    %v1028 = vsub.f32 %v946, %v1027
    %v1029 = vand.u32 %v1028, 4294901760
    %v1030 = vsub.f32 %v1028, %v1029
    %v1031 = vand.u32 %v1030, 4294901760
    %1032 = vmatmul.mubr.f32.gmra.mrb[0].mxu0 %v1031
    %v1033 = vpop.f32.mrb[0].mxu0
    %v1034 = vadd.f32 %v940, %v1033
    %v1035 = vpop.f32.mrb[0].mxu0
    %1036 = vdwg.mxu0
    %1037 = vmatprep.subr.mxu0 0.0
    %v1038 = vand.u32 %v924, 4294901760
    %v1039 = vsub.f32 %v924, %v1038
    %v1040 = vand.u32 %v1039, 4294901760
    %v1041 = vsub.f32 %v1039, %v1040
    %v1042 = vand.u32 %v1041, 4294901760
    %1043 = vmatpush1.msra.mxu0 %v1042
    %1044 = vmatprep.subr.mxu0 0.0
    %v1045 = vand.u32 %v925, 4294901760
    %v1046 = vsub.f32 %v925, %v1045
    %v1047 = vand.u32 %v1046, 4294901760
    %v1048 = vsub.f32 %v1046, %v1047
    %v1049 = vand.u32 %v1048, 4294901760
    %1050 = vmatpush1.msra.mxu0 %v1049
    %1051 = vmatprep.subr.mxu0 0.0
    %v1052 = vand.u32 %v926, 4294901760
    %v1053 = vsub.f32 %v926, %v1052
    %v1054 = vand.u32 %v1053, 4294901760
    %v1055 = vsub.f32 %v1053, %v1054
    %v1056 = vand.u32 %v1055, 4294901760
    %1057 = vmatpush1.msra.mxu0 %v1056
    %1058 = vmatprep.subr.mxu0 0.0
    %v1059 = vand.u32 %v927, 4294901760
    %v1060 = vsub.f32 %v927, %v1059
    %v1061 = vand.u32 %v1060, 4294901760
    %v1062 = vsub.f32 %v1060, %v1061
    %v1063 = vand.u32 %v1062, 4294901760
    %1064 = vmatpush1.msra.mxu0 %v1063
    %1065 = vmatprep.subr.mxu0 0.0
    %1066 = vmatpush1.msra.mxu0 0.0
    %1067 = vmatprep.subr.mxu0 0.0
    %1068 = vmatpush1.msra.mxu0 0.0
    %1069 = vmatprep.subr.mxu0 0.0
    %1070 = vmatpush1.msra.mxu0 0.0
    %1071 = vmatprep.subr.mxu0 0.0
    %1072 = vmatpush1.msra.mxu0 0.0
    %1073 = vmatprep.subr.mxu0 0.0
    %1074 = vmatpush1.msra.mxu0 0.0
    %1075 = vmatprep.subr.mxu0 0.0
    %1076 = vmatpush1.msra.mxu0 0.0
    %1077 = vmatprep.subr.mxu0 0.0
    %1078 = vmatpush1.msra.mxu0 0.0
    %1079 = vmatprep.subr.mxu0 0.0
    %1080 = vmatpush1.msra.mxu0 0.0
    %1081 = vmatprep.subr.mxu0 0.0
    %1082 = vmatpush1.msra.mxu0 0.0
    %1083 = vmatprep.subr.mxu0 0.0
    %1084 = vmatpush1.msra.mxu0 0.0
    %1085 = vmatprep.subr.mxu0 0.0
    %1086 = vmatpush1.msra.mxu0 0.0
    %1087 = vmatprep.subr.mxu0 0.0
    %1088 = vmatpush1.msra.mxu0 0.0
    %1089 = vmatprep.subr.mxu0 0.0
    %1090 = vmatpush1.msra.mxu0 0.0
    %1091 = vmatprep.subr.mxu0 0.0
    %1092 = vmatpush1.msra.mxu0 0.0
    %1093 = vmatprep.subr.mxu0 0.0
    %1094 = vmatpush1.msra.mxu0 0.0
    %1095 = vmatprep.subr.mxu0 0.0
    %1096 = vmatpush1.msra.mxu0 0.0
    %1097 = vmatprep.subr.mxu0 0.0
    %1098 = vmatpush1.msra.mxu0 0.0
    %1099 = vmatprep.subr.mxu0 0.0
    %1100 = vmatpush1.msra.mxu0 0.0
    %1101 = vmatprep.subr.mxu0 0.0
    %1102 = vmatpush1.msra.mxu0 0.0
    %1103 = vmatprep.subr.mxu0 0.0
    %1104 = vmatpush1.msra.mxu0 0.0
    %1105 = vmatprep.subr.mxu0 0.0
    %1106 = vmatpush1.msra.mxu0 0.0
    %1107 = vmatprep.subr.mxu0 0.0
    %1108 = vmatpush1.msra.mxu0 0.0
    %1109 = vmatprep.subr.mxu0 0.0
    %1110 = vmatpush1.msra.mxu0 0.0
    %1111 = vmatprep.subr.mxu0 0.0
    %1112 = vmatpush1.msra.mxu0 0.0
    %1113 = vmatprep.subr.mxu0 0.0
    %1114 = vmatpush1.msra.mxu0 0.0
    %1115 = vmatprep.subr.mxu0 0.0
    %1116 = vmatpush1.msra.mxu0 0.0
    %1117 = vmatprep.subr.mxu0 0.0
    %1118 = vmatpush1.msra.mxu0 0.0
    %1119 = vmatprep.subr.mxu0 0.0
    %1120 = vmatpush1.msra.mxu0 0.0
    %1121 = vmatprep.mubr.f32.mxu0 0.0
    %v1122 = vand.u32 %v943, 4294901760
    %1123 = vmatmul.mubr.f32.gmra.mrb[0].mxu0 %v1122
    %v1124 = vpop.f32.mrb[0].mxu0
    %v1125 = vadd.f32 %v1024, %v1124
    %v1126 = vpop.f32.mrb[0].mxu0
    %1127 = vmatprep.mubr.f32.mxu0 0.0
    %v1128 = vand.u32 %v946, 4294901760
    %1129 = vmatmul.mubr.f32.gmra.mrb[0].mxu0 %v1128
    %v1130 = vpop.f32.mrb[0].mxu0
    %v1131 = vadd.f32 %v1034, %v1130
    %v1132 = vpop.f32.mrb[0].mxu0
    %1133 = vdwg.mxu0
    %1134 = vmatprep.subr.mxu0 0.0
    %v1135 = vand.u32 %v924, 4294901760
    %v1136 = vsub.f32 %v924, %v1135
    %1137 = vmatpush1.msra.mxu0 %v1136
    %1138 = vmatprep.subr.mxu0 0.0
    %v1139 = vand.u32 %v925, 4294901760
    %v1140 = vsub.f32 %v925, %v1139
    %1141 = vmatpush1.msra.mxu0 %v1140
    %1142 = vmatprep.subr.mxu0 0.0
    %v1143 = vand.u32 %v926, 4294901760
    %v1144 = vsub.f32 %v926, %v1143
    %1145 = vmatpush1.msra.mxu0 %v1144
    %1146 = vmatprep.subr.mxu0 0.0
    %v1147 = vand.u32 %v927, 4294901760
    %v1148 = vsub.f32 %v927, %v1147
    %1149 = vmatpush1.msra.mxu0 %v1148
    %1150 = vmatprep.subr.mxu0 0.0
    %1151 = vmatpush1.msra.mxu0 0.0
    %1152 = vmatprep.subr.mxu0 0.0
    %1153 = vmatpush1.msra.mxu0 0.0
    %1154 = vmatprep.subr.mxu0 0.0
    %1155 = vmatpush1.msra.mxu0 0.0
    %1156 = vmatprep.subr.mxu0 0.0
    %1157 = vmatpush1.msra.mxu0 0.0
    %1158 = vmatprep.subr.mxu0 0.0
    %1159 = vmatpush1.msra.mxu0 0.0
    %1160 = vmatprep.subr.mxu0 0.0
    %1161 = vmatpush1.msra.mxu0 0.0
    %1162 = vmatprep.subr.mxu0 0.0
    %1163 = vmatpush1.msra.mxu0 0.0
    %1164 = vmatprep.subr.mxu0 0.0
    %1165 = vmatpush1.msra.mxu0 0.0
    %1166 = vmatprep.subr.mxu0 0.0
    %1167 = vmatpush1.msra.mxu0 0.0
    %1168 = vmatprep.subr.mxu0 0.0
    %1169 = vmatpush1.msra.mxu0 0.0
    %1170 = vmatprep.subr.mxu0 0.0
    %1171 = vmatpush1.msra.mxu0 0.0
    %1172 = vmatprep.subr.mxu0 0.0
    %1173 = vmatpush1.msra.mxu0 0.0
    %1174 = vmatprep.subr.mxu0 0.0
    %1175 = vmatpush1.msra.mxu0 0.0
    %1176 = vmatprep.subr.mxu0 0.0
    %1177 = vmatpush1.msra.mxu0 0.0
    %1178 = vmatprep.subr.mxu0 0.0
    %1179 = vmatpush1.msra.mxu0 0.0
    %1180 = vmatprep.subr.mxu0 0.0
    %1181 = vmatpush1.msra.mxu0 0.0
    %1182 = vmatprep.subr.mxu0 0.0
    %1183 = vmatpush1.msra.mxu0 0.0
    %1184 = vmatprep.subr.mxu0 0.0
    %1185 = vmatpush1.msra.mxu0 0.0
    %1186 = vmatprep.subr.mxu0 0.0
    %1187 = vmatpush1.msra.mxu0 0.0
    %1188 = vmatprep.subr.mxu0 0.0
    %1189 = vmatpush1.msra.mxu0 0.0
    %1190 = vmatprep.subr.mxu0 0.0
    %1191 = vmatpush1.msra.mxu0 0.0
    %1192 = vmatprep.subr.mxu0 0.0
    %1193 = vmatpush1.msra.mxu0 0.0
    %1194 = vmatprep.subr.mxu0 0.0
    %1195 = vmatpush1.msra.mxu0 0.0
    %1196 = vmatprep.subr.mxu0 0.0
    %1197 = vmatpush1.msra.mxu0 0.0
    %1198 = vmatprep.subr.mxu0 0.0
    %1199 = vmatpush1.msra.mxu0 0.0
    %1200 = vmatprep.subr.mxu0 0.0
    %1201 = vmatpush1.msra.mxu0 0.0
    %1202 = vmatprep.subr.mxu0 0.0
    %1203 = vmatpush1.msra.mxu0 0.0
    %1204 = vmatprep.subr.mxu0 0.0
    %1205 = vmatpush1.msra.mxu0 0.0
    %1206 = vmatprep.mubr.f32.mxu0 0.0
    %v1207 = vand.u32 %v943, 4294901760
    %v1208 = vsub.f32 %v943, %v1207
    %1209 = vmatmul.mubr.f32.gmra.mrb[0].mxu0 %v1208
    %v1210 = vpop.f32.mrb[0].mxu0
    %v1211 = vadd.f32 %v1125, %v1210
    %v1212 = vpop.f32.mrb[0].mxu0
    %1213 = vmatprep.mubr.f32.mxu0 0.0
    %v1214 = vand.u32 %v946, 4294901760
    %v1215 = vsub.f32 %v946, %v1214
    %1216 = vmatmul.mubr.f32.gmra.mrb[0].mxu0 %v1215
    %v1217 = vpop.f32.mrb[0].mxu0
    %v1218 = vadd.f32 %v1131, %v1217
    %v1219 = vpop.f32.mrb[0].mxu0
    %1220 = vdwg.mxu0
    %1221 = vmatprep.subr.mxu0 0.0
    %v1222 = vand.u32 %v924, 4294901760
    %1223 = vmatpush1.msra.mxu0 %v1222
    %1224 = vmatprep.subr.mxu0 0.0
    %v1225 = vand.u32 %v925, 4294901760
    %1226 = vmatpush1.msra.mxu0 %v1225
    %1227 = vmatprep.subr.mxu0 0.0
    %v1228 = vand.u32 %v926, 4294901760
    %1229 = vmatpush1.msra.mxu0 %v1228
    %1230 = vmatprep.subr.mxu0 0.0
    %v1231 = vand.u32 %v927, 4294901760
    %1232 = vmatpush1.msra.mxu0 %v1231
    %1233 = vmatprep.subr.mxu0 0.0
    %1234 = vmatpush1.msra.mxu0 0.0
    %1235 = vmatprep.subr.mxu0 0.0
    %1236 = vmatpush1.msra.mxu0 0.0
    %1237 = vmatprep.subr.mxu0 0.0
    %1238 = vmatpush1.msra.mxu0 0.0
    %1239 = vmatprep.subr.mxu0 0.0
    %1240 = vmatpush1.msra.mxu0 0.0
    %1241 = vmatprep.subr.mxu0 0.0
    %1242 = vmatpush1.msra.mxu0 0.0
    %1243 = vmatprep.subr.mxu0 0.0
    %1244 = vmatpush1.msra.mxu0 0.0
    %1245 = vmatprep.subr.mxu0 0.0
    %1246 = vmatpush1.msra.mxu0 0.0
    %1247 = vmatprep.subr.mxu0 0.0
    %1248 = vmatpush1.msra.mxu0 0.0
    %1249 = vmatprep.subr.mxu0 0.0
    %1250 = vmatpush1.msra.mxu0 0.0
    %1251 = vmatprep.subr.mxu0 0.0
    %1252 = vmatpush1.msra.mxu0 0.0
    %1253 = vmatprep.subr.mxu0 0.0
    %1254 = vmatpush1.msra.mxu0 0.0
    %1255 = vmatprep.subr.mxu0 0.0
    %1256 = vmatpush1.msra.mxu0 0.0
    %1257 = vmatprep.subr.mxu0 0.0
    %1258 = vmatpush1.msra.mxu0 0.0
    %1259 = vmatprep.subr.mxu0 0.0
    %1260 = vmatpush1.msra.mxu0 0.0
    %1261 = vmatprep.subr.mxu0 0.0
    %1262 = vmatpush1.msra.mxu0 0.0
    %1263 = vmatprep.subr.mxu0 0.0
    %1264 = vmatpush1.msra.mxu0 0.0
    %1265 = vmatprep.subr.mxu0 0.0
    %1266 = vmatpush1.msra.mxu0 0.0
    %1267 = vmatprep.subr.mxu0 0.0
    %1268 = vmatpush1.msra.mxu0 0.0
    %1269 = vmatprep.subr.mxu0 0.0
    %1270 = vmatpush1.msra.mxu0 0.0
    %1271 = vmatprep.subr.mxu0 0.0
    %1272 = vmatpush1.msra.mxu0 0.0
    %1273 = vmatprep.subr.mxu0 0.0
    %1274 = vmatpush1.msra.mxu0 0.0
    %1275 = vmatprep.subr.mxu0 0.0
    %1276 = vmatpush1.msra.mxu0 0.0
    %1277 = vmatprep.subr.mxu0 0.0
    %1278 = vmatpush1.msra.mxu0 0.0
    %1279 = vmatprep.subr.mxu0 0.0
    %1280 = vmatpush1.msra.mxu0 0.0
    %1281 = vmatprep.subr.mxu0 0.0
    %1282 = vmatpush1.msra.mxu0 0.0
    %1283 = vmatprep.subr.mxu0 0.0
    %1284 = vmatpush1.msra.mxu0 0.0
    %1285 = vmatprep.subr.mxu0 0.0
    %1286 = vmatpush1.msra.mxu0 0.0
    %1287 = vmatprep.subr.mxu0 0.0
    %1288 = vmatpush1.msra.mxu0 0.0
    %1289 = vmatprep.mubr.f32.mxu0 0.0
    %v1290 = vand.u32 %v943, 4294901760
    %v1291 = vsub.f32 %v943, %v1290
    %v1292 = vand.u32 %v1291, 4294901760
    %1293 = vmatmul.mubr.f32.gmra.mrb[0].mxu0 %v1292
    %v1294 = vpop.f32.mrb[0].mxu0
    %v1295 = vadd.f32 %v1211, %v1294
    %v1296 = vpop.f32.mrb[0].mxu0
    %1297 = vmatprep.mubr.f32.mxu0 0.0
    %v1298 = vand.u32 %v946, 4294901760
    %v1299 = vsub.f32 %v946, %v1298
    %v1300 = vand.u32 %v1299, 4294901760
    %1301 = vmatmul.mubr.f32.gmra.mrb[0].mxu0 %v1300
    %v1302 = vpop.f32.mrb[0].mxu0
    %v1303 = vadd.f32 %v1218, %v1302
    %v1304 = vpop.f32.mrb[0].mxu0
    %1305 = vdwg.mxu0
    %1306 = vmatprep.subr.mxu0 0.0
    %v1307 = vand.u32 %v924, 4294901760
    %v1308 = vsub.f32 %v924, %v1307
    %v1309 = vand.u32 %v1308, 4294901760
    %1310 = vmatpush1.msra.mxu0 %v1309
    %1311 = vmatprep.subr.mxu0 0.0
    %v1312 = vand.u32 %v925, 4294901760
    %v1313 = vsub.f32 %v925, %v1312
    %v1314 = vand.u32 %v1313, 4294901760
    %1315 = vmatpush1.msra.mxu0 %v1314
    %1316 = vmatprep.subr.mxu0 0.0
    %v1317 = vand.u32 %v926, 4294901760
    %v1318 = vsub.f32 %v926, %v1317
    %v1319 = vand.u32 %v1318, 4294901760
    %1320 = vmatpush1.msra.mxu0 %v1319
    %1321 = vmatprep.subr.mxu0 0.0
    %v1322 = vand.u32 %v927, 4294901760
    %v1323 = vsub.f32 %v927, %v1322
    %v1324 = vand.u32 %v1323, 4294901760
    %1325 = vmatpush1.msra.mxu0 %v1324
    %1326 = vmatprep.subr.mxu0 0.0
    %1327 = vmatpush1.msra.mxu0 0.0
    %1328 = vmatprep.subr.mxu0 0.0
    %1329 = vmatpush1.msra.mxu0 0.0
    %1330 = vmatprep.subr.mxu0 0.0
    %1331 = vmatpush1.msra.mxu0 0.0
    %1332 = vmatprep.subr.mxu0 0.0
    %1333 = vmatpush1.msra.mxu0 0.0
    %1334 = vmatprep.subr.mxu0 0.0
    %1335 = vmatpush1.msra.mxu0 0.0
    %1336 = vmatprep.subr.mxu0 0.0
    %1337 = vmatpush1.msra.mxu0 0.0
    %1338 = vmatprep.subr.mxu0 0.0
    %1339 = vmatpush1.msra.mxu0 0.0
    %1340 = vmatprep.subr.mxu0 0.0
    %1341 = vmatpush1.msra.mxu0 0.0
    %1342 = vmatprep.subr.mxu0 0.0
    %1343 = vmatpush1.msra.mxu0 0.0
    %1344 = vmatprep.subr.mxu0 0.0
    %1345 = vmatpush1.msra.mxu0 0.0
    %1346 = vmatprep.subr.mxu0 0.0
    %1347 = vmatpush1.msra.mxu0 0.0
    %1348 = vmatprep.subr.mxu0 0.0
    %1349 = vmatpush1.msra.mxu0 0.0
    %1350 = vmatprep.subr.mxu0 0.0
    %1351 = vmatpush1.msra.mxu0 0.0
    %1352 = vmatprep.subr.mxu0 0.0
    %1353 = vmatpush1.msra.mxu0 0.0
    %1354 = vmatprep.subr.mxu0 0.0
    %1355 = vmatpush1.msra.mxu0 0.0
    %1356 = vmatprep.subr.mxu0 0.0
    %1357 = vmatpush1.msra.mxu0 0.0
    %1358 = vmatprep.subr.mxu0 0.0
    %1359 = vmatpush1.msra.mxu0 0.0
    %1360 = vmatprep.subr.mxu0 0.0
    %1361 = vmatpush1.msra.mxu0 0.0
    %1362 = vmatprep.subr.mxu0 0.0
    %1363 = vmatpush1.msra.mxu0 0.0
    %1364 = vmatprep.subr.mxu0 0.0
    %1365 = vmatpush1.msra.mxu0 0.0
    %1366 = vmatprep.subr.mxu0 0.0
    %1367 = vmatpush1.msra.mxu0 0.0
    %1368 = vmatprep.subr.mxu0 0.0
    %1369 = vmatpush1.msra.mxu0 0.0
    %1370 = vmatprep.subr.mxu0 0.0
    %1371 = vmatpush1.msra.mxu0 0.0
    %1372 = vmatprep.subr.mxu0 0.0
    %1373 = vmatpush1.msra.mxu0 0.0
    %1374 = vmatprep.subr.mxu0 0.0
    %1375 = vmatpush1.msra.mxu0 0.0
    %1376 = vmatprep.subr.mxu0 0.0
    %1377 = vmatpush1.msra.mxu0 0.0
    %1378 = vmatprep.subr.mxu0 0.0
    %1379 = vmatpush1.msra.mxu0 0.0
    %1380 = vmatprep.subr.mxu0 0.0
    %1381 = vmatpush1.msra.mxu0 0.0
    %1382 = vmatprep.mubr.f32.mxu0 0.0
    %v1383 = vand.u32 %v943, 4294901760
    %1384 = vmatmul.mubr.f32.gmra.mrb[0].mxu0 %v1383
    %v1385 = vpop.f32.mrb[0].mxu0
    %v1386 = vadd.f32 %v1295, %v1385
    %v1387 = vpop.f32.mrb[0].mxu0
    %1388 = vmatprep.mubr.f32.mxu0 0.0
    %v1389 = vand.u32 %v946, 4294901760
    %1390 = vmatmul.mubr.f32.gmra.mrb[0].mxu0 %v1389
    %v1391 = vpop.f32.mrb[0].mxu0
    %v1392 = vadd.f32 %v1303, %v1391
    %v1393 = vpop.f32.mrb[0].mxu0
    %1394 = vdwg.mxu0
    %1395 = vmatprep.subr.mxu0 0.0
    %v1396 = vand.u32 %v924, 4294901760
    %1397 = vmatpush1.msra.mxu0 %v1396
    %1398 = vmatprep.subr.mxu0 0.0
    %v1399 = vand.u32 %v925, 4294901760
    %1400 = vmatpush1.msra.mxu0 %v1399
    %1401 = vmatprep.subr.mxu0 0.0
    %v1402 = vand.u32 %v926, 4294901760
    %1403 = vmatpush1.msra.mxu0 %v1402
    %1404 = vmatprep.subr.mxu0 0.0
    %v1405 = vand.u32 %v927, 4294901760
    %1406 = vmatpush1.msra.mxu0 %v1405
    %1407 = vmatprep.subr.mxu0 0.0
    %1408 = vmatpush1.msra.mxu0 0.0
    %1409 = vmatprep.subr.mxu0 0.0
    %1410 = vmatpush1.msra.mxu0 0.0
    %1411 = vmatprep.subr.mxu0 0.0
    %1412 = vmatpush1.msra.mxu0 0.0
    %1413 = vmatprep.subr.mxu0 0.0
    %1414 = vmatpush1.msra.mxu0 0.0
    %1415 = vmatprep.subr.mxu0 0.0
    %1416 = vmatpush1.msra.mxu0 0.0
    %1417 = vmatprep.subr.mxu0 0.0
    %1418 = vmatpush1.msra.mxu0 0.0
    %1419 = vmatprep.subr.mxu0 0.0
    %1420 = vmatpush1.msra.mxu0 0.0
    %1421 = vmatprep.subr.mxu0 0.0
    %1422 = vmatpush1.msra.mxu0 0.0
    %1423 = vmatprep.subr.mxu0 0.0
    %1424 = vmatpush1.msra.mxu0 0.0
    %1425 = vmatprep.subr.mxu0 0.0
    %1426 = vmatpush1.msra.mxu0 0.0
    %1427 = vmatprep.subr.mxu0 0.0
    %1428 = vmatpush1.msra.mxu0 0.0
    %1429 = vmatprep.subr.mxu0 0.0
    %1430 = vmatpush1.msra.mxu0 0.0
    %1431 = vmatprep.subr.mxu0 0.0
    %1432 = vmatpush1.msra.mxu0 0.0
    %1433 = vmatprep.subr.mxu0 0.0
    %1434 = vmatpush1.msra.mxu0 0.0
    %1435 = vmatprep.subr.mxu0 0.0
    %1436 = vmatpush1.msra.mxu0 0.0
    %1437 = vmatprep.subr.mxu0 0.0
    %1438 = vmatpush1.msra.mxu0 0.0
    %1439 = vmatprep.subr.mxu0 0.0
    %1440 = vmatpush1.msra.mxu0 0.0
    %1441 = vmatprep.subr.mxu0 0.0
    %1442 = vmatpush1.msra.mxu0 0.0
    %1443 = vmatprep.subr.mxu0 0.0
    %1444 = vmatpush1.msra.mxu0 0.0
    %1445 = vmatprep.subr.mxu0 0.0
    %1446 = vmatpush1.msra.mxu0 0.0
    %1447 = vmatprep.subr.mxu0 0.0
    %1448 = vmatpush1.msra.mxu0 0.0
    %1449 = vmatprep.subr.mxu0 0.0
    %1450 = vmatpush1.msra.mxu0 0.0
    %1451 = vmatprep.subr.mxu0 0.0
    %1452 = vmatpush1.msra.mxu0 0.0
    %1453 = vmatprep.subr.mxu0 0.0
    %1454 = vmatpush1.msra.mxu0 0.0
    %1455 = vmatprep.subr.mxu0 0.0
    %1456 = vmatpush1.msra.mxu0 0.0
    %1457 = vmatprep.subr.mxu0 0.0
    %1458 = vmatpush1.msra.mxu0 0.0
    %1459 = vmatprep.subr.mxu0 0.0
    %1460 = vmatpush1.msra.mxu0 0.0
    %1461 = vmatprep.subr.mxu0 0.0
    %1462 = vmatpush1.msra.mxu0 0.0
    %1463 = vmatprep.mubr.f32.mxu0 0.0
    %v1464 = vand.u32 %v943, 4294901760
    %1465 = vmatmul.mubr.f32.gmra.mrb[0].mxu0 %v1464
    %v1466 = vpop.f32.mrb[0].mxu0
    %v1467 = vadd.f32 %v1386, %v1466
    %v1468 = vpop.f32.mrb[0].mxu0
    %1469 = vmatprep.mubr.f32.mxu0 0.0
    %v1470 = vand.u32 %v946, 4294901760
    %1471 = vmatmul.mubr.f32.gmra.mrb[0].mxu0 %v1470
    %v1472 = vpop.f32.mrb[0].mxu0
    %v1473 = vadd.f32 %v1392, %v1472
    %v1474 = vpop.f32.mrb[0].mxu0
    %1475 = vdwg.mxu0
    %vm1476 = vcmp.gt.f32.partialorder %v1467, 0.0
    %vm1477 = vcmp.gt.f32.partialorder %v1473, 0.0
    %v1478 = vmin.f32 %v1467, 0.0
    %v1479 = vmin.f32 %v1473, 0.0
    %v1480 = vmul.f32 %v1478, 1.442695
    %v1481 = vpow.pop %v1480
    %v1482 = vmul.f32 %v1479, 1.442695
    %v1483 = vpow.pop %v1482
    %v1484 = vsub.f32 %v1481, 1.0
    %v1485 = vsub.f32 %v1483, 1.0
    %v1486 = vsel %vm1476, %v1467, %v1484
    %v1487 = vsel %vm1477, %v1473, %v1485
    %v1488 = vld [vmem:[%s5] sm:$0x1]
    %v1489 = vld [vmem:[#allocation2] sm:$0x1]
    %1491 = vset.pattern.permute.xlu0 0
    %1492 = vperm.xlu0 %1491, %v1489
    %v1493 = vpop.permute.xlu0 %1492
    %v1495 = vlaneseq
    %v1496 = vshrl.u32 %v1495, 7
    %v1497 = vsub.s32 0, %v1496
    %v1498 = vrot.slane %v1493, %v1497
    %vm1499 = vcmask 130048
    %v1501 = vsel %vm1499, %v1488, 0
    %1503 = vmatprep.subr.mxu0 0.0
    %v1504 = vand.u32 %v1486, 4294901760
    %1505 = vmatpush1.msra.mxu0 %v1504
    %1506 = vmatprep.subr.mxu0 0.0
    %v1507 = vand.u32 %v1487, 4294901760
    %1508 = vmatpush1.msra.mxu0 %v1507
    %1509 = vmatprep.subr.mxu0 0.0
    %1510 = vmatpush1.msra.mxu0 0.0
    %1511 = vmatprep.subr.mxu0 0.0
    %1512 = vmatpush1.msra.mxu0 0.0
    %1513 = vmatprep.subr.mxu0 0.0
    %1514 = vmatpush1.msra.mxu0 0.0
    %1515 = vmatprep.subr.mxu0 0.0
    %1516 = vmatpush1.msra.mxu0 0.0
    %1517 = vmatprep.subr.mxu0 0.0
    %1518 = vmatpush1.msra.mxu0 0.0
    %1519 = vmatprep.subr.mxu0 0.0
    %1520 = vmatpush1.msra.mxu0 0.0
    %1521 = vmatprep.subr.mxu0 0.0
    %1522 = vmatpush1.msra.mxu0 0.0
    %1523 = vmatprep.subr.mxu0 0.0
    %1524 = vmatpush1.msra.mxu0 0.0
    %1525 = vmatprep.subr.mxu0 0.0
    %1526 = vmatpush1.msra.mxu0 0.0
    %1527 = vmatprep.subr.mxu0 0.0
    %1528 = vmatpush1.msra.mxu0 0.0
    %1529 = vmatprep.subr.mxu0 0.0
    %1530 = vmatpush1.msra.mxu0 0.0
    %1531 = vmatprep.subr.mxu0 0.0
    %1532 = vmatpush1.msra.mxu0 0.0
    %1533 = vmatprep.subr.mxu0 0.0
    %1534 = vmatpush1.msra.mxu0 0.0
    %1535 = vmatprep.subr.mxu0 0.0
    %1536 = vmatpush1.msra.mxu0 0.0
    %1537 = vmatprep.subr.mxu0 0.0
    %1538 = vmatpush1.msra.mxu0 0.0
    %1539 = vmatprep.subr.mxu0 0.0
    %1540 = vmatpush1.msra.mxu0 0.0
    %1541 = vmatprep.subr.mxu0 0.0
    %1542 = vmatpush1.msra.mxu0 0.0
    %1543 = vmatprep.subr.mxu0 0.0
    %1544 = vmatpush1.msra.mxu0 0.0
    %1545 = vmatprep.subr.mxu0 0.0
    %1546 = vmatpush1.msra.mxu0 0.0
    %1547 = vmatprep.subr.mxu0 0.0
    %1548 = vmatpush1.msra.mxu0 0.0
    %1549 = vmatprep.subr.mxu0 0.0
    %1550 = vmatpush1.msra.mxu0 0.0
    %1551 = vmatprep.subr.mxu0 0.0
    %1552 = vmatpush1.msra.mxu0 0.0
    %1553 = vmatprep.subr.mxu0 0.0
    %1554 = vmatpush1.msra.mxu0 0.0
    %1555 = vmatprep.subr.mxu0 0.0
    %1556 = vmatpush1.msra.mxu0 0.0
    %1557 = vmatprep.subr.mxu0 0.0
    %1558 = vmatpush1.msra.mxu0 0.0
    %1559 = vmatprep.subr.mxu0 0.0
    %1560 = vmatpush1.msra.mxu0 0.0
    %1561 = vmatprep.subr.mxu0 0.0
    %1562 = vmatpush1.msra.mxu0 0.0
    %1563 = vmatprep.subr.mxu0 0.0
    %1564 = vmatpush1.msra.mxu0 0.0
    %1565 = vmatprep.subr.mxu0 0.0
    %1566 = vmatpush1.msra.mxu0 0.0
    %1567 = vmatprep.subr.mxu0 0.0
    %1568 = vmatpush1.msra.mxu0 0.0
    %1569 = vmatprep.mubr.f32.mxu0 0.0
    %v1570 = vand.u32 %v1501, 4294901760
    %v1571 = vsub.f32 %v1501, %v1570
    %v1572 = vand.u32 %v1571, 4294901760
    %v1573 = vsub.f32 %v1571, %v1572
    %v1574 = vand.u32 %v1573, 4294901760
    %1575 = vmatmul.mubr.f32.gmra.mrb[0].mxu0 %v1574
    %v1576 = vpop.f32.mrb[0].mxu0
    %v1577 = vadd.f32 %v1498, %v1576
    %v1578 = vpop.f32.mrb[0].mxu0
    %1579 = vdwg.mxu0
    %1580 = vmatprep.subr.mxu0 0.0
    %v1581 = vand.u32 %v1486, 4294901760
    %v1582 = vsub.f32 %v1486, %v1581
    %v1583 = vand.u32 %v1582, 4294901760
    %v1584 = vsub.f32 %v1582, %v1583
    %v1585 = vand.u32 %v1584, 4294901760
    %1586 = vmatpush1.msra.mxu0 %v1585
    %1587 = vmatprep.subr.mxu0 0.0
    %v1588 = vand.u32 %v1487, 4294901760
    %v1589 = vsub.f32 %v1487, %v1588
    %v1590 = vand.u32 %v1589, 4294901760
    %v1591 = vsub.f32 %v1589, %v1590
    %v1592 = vand.u32 %v1591, 4294901760
    %1593 = vmatpush1.msra.mxu0 %v1592
    %1594 = vmatprep.subr.mxu0 0.0
    %1595 = vmatpush1.msra.mxu0 0.0
    %1596 = vmatprep.subr.mxu0 0.0
    %1597 = vmatpush1.msra.mxu0 0.0
    %1598 = vmatprep.subr.mxu0 0.0
    %1599 = vmatpush1.msra.mxu0 0.0
    %1600 = vmatprep.subr.mxu0 0.0
    %1601 = vmatpush1.msra.mxu0 0.0
    %1602 = vmatprep.subr.mxu0 0.0
    %1603 = vmatpush1.msra.mxu0 0.0
    %1604 = vmatprep.subr.mxu0 0.0
    %1605 = vmatpush1.msra.mxu0 0.0
    %1606 = vmatprep.subr.mxu0 0.0
    %1607 = vmatpush1.msra.mxu0 0.0
    %1608 = vmatprep.subr.mxu0 0.0
    %1609 = vmatpush1.msra.mxu0 0.0
    %1610 = vmatprep.subr.mxu0 0.0
    %1611 = vmatpush1.msra.mxu0 0.0
    %1612 = vmatprep.subr.mxu0 0.0
    %1613 = vmatpush1.msra.mxu0 0.0
    %1614 = vmatprep.subr.mxu0 0.0
    %1615 = vmatpush1.msra.mxu0 0.0
    %1616 = vmatprep.subr.mxu0 0.0
    %1617 = vmatpush1.msra.mxu0 0.0
    %1618 = vmatprep.subr.mxu0 0.0
    %1619 = vmatpush1.msra.mxu0 0.0
    %1620 = vmatprep.subr.mxu0 0.0
    %1621 = vmatpush1.msra.mxu0 0.0
    %1622 = vmatprep.subr.mxu0 0.0
    %1623 = vmatpush1.msra.mxu0 0.0
    %1624 = vmatprep.subr.mxu0 0.0
    %1625 = vmatpush1.msra.mxu0 0.0
    %1626 = vmatprep.subr.mxu0 0.0
    %1627 = vmatpush1.msra.mxu0 0.0
    %1628 = vmatprep.subr.mxu0 0.0
    %1629 = vmatpush1.msra.mxu0 0.0
    %1630 = vmatprep.subr.mxu0 0.0
    %1631 = vmatpush1.msra.mxu0 0.0
    %1632 = vmatprep.subr.mxu0 0.0
    %1633 = vmatpush1.msra.mxu0 0.0
    %1634 = vmatprep.subr.mxu0 0.0
    %1635 = vmatpush1.msra.mxu0 0.0
    %1636 = vmatprep.subr.mxu0 0.0
    %1637 = vmatpush1.msra.mxu0 0.0
    %1638 = vmatprep.subr.mxu0 0.0
    %1639 = vmatpush1.msra.mxu0 0.0
    %1640 = vmatprep.subr.mxu0 0.0
    %1641 = vmatpush1.msra.mxu0 0.0
    %1642 = vmatprep.subr.mxu0 0.0
    %1643 = vmatpush1.msra.mxu0 0.0
    %1644 = vmatprep.subr.mxu0 0.0
    %1645 = vmatpush1.msra.mxu0 0.0
    %1646 = vmatprep.subr.mxu0 0.0
    %1647 = vmatpush1.msra.mxu0 0.0
    %1648 = vmatprep.subr.mxu0 0.0
    %1649 = vmatpush1.msra.mxu0 0.0
    %1650 = vmatprep.subr.mxu0 0.0
    %1651 = vmatpush1.msra.mxu0 0.0
    %1652 = vmatprep.subr.mxu0 0.0
    %1653 = vmatpush1.msra.mxu0 0.0
    %1654 = vmatprep.mubr.f32.mxu0 0.0
    %v1655 = vand.u32 %v1501, 4294901760
    %1656 = vmatmul.mubr.f32.gmra.mrb[0].mxu0 %v1655
    %v1657 = vpop.f32.mrb[0].mxu0
    %v1658 = vadd.f32 %v1577, %v1657
    %v1659 = vpop.f32.mrb[0].mxu0
    %1660 = vdwg.mxu0
    %1661 = vmatprep.subr.mxu0 0.0
    %v1662 = vand.u32 %v1486, 4294901760
    %v1663 = vsub.f32 %v1486, %v1662
    %1664 = vmatpush1.msra.mxu0 %v1663
    %1665 = vmatprep.subr.mxu0 0.0
    %v1666 = vand.u32 %v1487, 4294901760
    %v1667 = vsub.f32 %v1487, %v1666
    %1668 = vmatpush1.msra.mxu0 %v1667
    %1669 = vmatprep.subr.mxu0 0.0
    %1670 = vmatpush1.msra.mxu0 0.0
    %1671 = vmatprep.subr.mxu0 0.0
    %1672 = vmatpush1.msra.mxu0 0.0
    %1673 = vmatprep.subr.mxu0 0.0
    %1674 = vmatpush1.msra.mxu0 0.0
    %1675 = vmatprep.subr.mxu0 0.0
    %1676 = vmatpush1.msra.mxu0 0.0
    %1677 = vmatprep.subr.mxu0 0.0
    %1678 = vmatpush1.msra.mxu0 0.0
    %1679 = vmatprep.subr.mxu0 0.0
    %1680 = vmatpush1.msra.mxu0 0.0
    %1681 = vmatprep.subr.mxu0 0.0
    %1682 = vmatpush1.msra.mxu0 0.0
    %1683 = vmatprep.subr.mxu0 0.0
    %1684 = vmatpush1.msra.mxu0 0.0
    %1685 = vmatprep.subr.mxu0 0.0
    %1686 = vmatpush1.msra.mxu0 0.0
    %1687 = vmatprep.subr.mxu0 0.0
    %1688 = vmatpush1.msra.mxu0 0.0
    %1689 = vmatprep.subr.mxu0 0.0
    %1690 = vmatpush1.msra.mxu0 0.0
    %1691 = vmatprep.subr.mxu0 0.0
    %1692 = vmatpush1.msra.mxu0 0.0
    %1693 = vmatprep.subr.mxu0 0.0
    %1694 = vmatpush1.msra.mxu0 0.0
    %1695 = vmatprep.subr.mxu0 0.0
    %1696 = vmatpush1.msra.mxu0 0.0
    %1697 = vmatprep.subr.mxu0 0.0
    %1698 = vmatpush1.msra.mxu0 0.0
    %1699 = vmatprep.subr.mxu0 0.0
    %1700 = vmatpush1.msra.mxu0 0.0
    %1701 = vmatprep.subr.mxu0 0.0
    %1702 = vmatpush1.msra.mxu0 0.0
    %1703 = vmatprep.subr.mxu0 0.0
    %1704 = vmatpush1.msra.mxu0 0.0
    %1705 = vmatprep.subr.mxu0 0.0
    %1706 = vmatpush1.msra.mxu0 0.0
    %1707 = vmatprep.subr.mxu0 0.0
    %1708 = vmatpush1.msra.mxu0 0.0
    %1709 = vmatprep.subr.mxu0 0.0
    %1710 = vmatpush1.msra.mxu0 0.0
    %1711 = vmatprep.subr.mxu0 0.0
    %1712 = vmatpush1.msra.mxu0 0.0
    %1713 = vmatprep.subr.mxu0 0.0
    %1714 = vmatpush1.msra.mxu0 0.0
    %1715 = vmatprep.subr.mxu0 0.0
    %1716 = vmatpush1.msra.mxu0 0.0
    %1717 = vmatprep.subr.mxu0 0.0
    %1718 = vmatpush1.msra.mxu0 0.0
    %1719 = vmatprep.subr.mxu0 0.0
    %1720 = vmatpush1.msra.mxu0 0.0
    %1721 = vmatprep.subr.mxu0 0.0
    %1722 = vmatpush1.msra.mxu0 0.0
    %1723 = vmatprep.subr.mxu0 0.0
    %1724 = vmatpush1.msra.mxu0 0.0
    %1725 = vmatprep.subr.mxu0 0.0
    %1726 = vmatpush1.msra.mxu0 0.0
    %1727 = vmatprep.subr.mxu0 0.0
    %1728 = vmatpush1.msra.mxu0 0.0
    %1729 = vmatprep.mubr.f32.mxu0 0.0
    %v1730 = vand.u32 %v1501, 4294901760
    %v1731 = vsub.f32 %v1501, %v1730
    %1732 = vmatmul.mubr.f32.gmra.mrb[0].mxu0 %v1731
    %v1733 = vpop.f32.mrb[0].mxu0
    %v1734 = vadd.f32 %v1658, %v1733
    %v1735 = vpop.f32.mrb[0].mxu0
    %1736 = vdwg.mxu0
    %1737 = vmatprep.subr.mxu0 0.0
    %v1738 = vand.u32 %v1486, 4294901760
    %1739 = vmatpush1.msra.mxu0 %v1738
    %1740 = vmatprep.subr.mxu0 0.0
    %v1741 = vand.u32 %v1487, 4294901760
    %1742 = vmatpush1.msra.mxu0 %v1741
    %1743 = vmatprep.subr.mxu0 0.0
    %1744 = vmatpush1.msra.mxu0 0.0
    %1745 = vmatprep.subr.mxu0 0.0
    %1746 = vmatpush1.msra.mxu0 0.0
    %1747 = vmatprep.subr.mxu0 0.0
    %1748 = vmatpush1.msra.mxu0 0.0
    %1749 = vmatprep.subr.mxu0 0.0
    %1750 = vmatpush1.msra.mxu0 0.0
    %1751 = vmatprep.subr.mxu0 0.0
    %1752 = vmatpush1.msra.mxu0 0.0
    %1753 = vmatprep.subr.mxu0 0.0
    %1754 = vmatpush1.msra.mxu0 0.0
    %1755 = vmatprep.subr.mxu0 0.0
    %1756 = vmatpush1.msra.mxu0 0.0
    %1757 = vmatprep.subr.mxu0 0.0
    %1758 = vmatpush1.msra.mxu0 0.0
    %1759 = vmatprep.subr.mxu0 0.0
    %1760 = vmatpush1.msra.mxu0 0.0
    %1761 = vmatprep.subr.mxu0 0.0
    %1762 = vmatpush1.msra.mxu0 0.0
    %1763 = vmatprep.subr.mxu0 0.0
    %1764 = vmatpush1.msra.mxu0 0.0
    %1765 = vmatprep.subr.mxu0 0.0
    %1766 = vmatpush1.msra.mxu0 0.0
    %1767 = vmatprep.subr.mxu0 0.0
    %1768 = vmatpush1.msra.mxu0 0.0
    %1769 = vmatprep.subr.mxu0 0.0
    %1770 = vmatpush1.msra.mxu0 0.0
    %1771 = vmatprep.subr.mxu0 0.0
    %1772 = vmatpush1.msra.mxu0 0.0
    %1773 = vmatprep.subr.mxu0 0.0
    %1774 = vmatpush1.msra.mxu0 0.0
    %1775 = vmatprep.subr.mxu0 0.0
    %1776 = vmatpush1.msra.mxu0 0.0
    %1777 = vmatprep.subr.mxu0 0.0
    %1778 = vmatpush1.msra.mxu0 0.0
    %1779 = vmatprep.subr.mxu0 0.0
    %1780 = vmatpush1.msra.mxu0 0.0
    %1781 = vmatprep.subr.mxu0 0.0
    %1782 = vmatpush1.msra.mxu0 0.0
    %1783 = vmatprep.subr.mxu0 0.0
    %1784 = vmatpush1.msra.mxu0 0.0
    %1785 = vmatprep.subr.mxu0 0.0
    %1786 = vmatpush1.msra.mxu0 0.0
    %1787 = vmatprep.subr.mxu0 0.0
    %1788 = vmatpush1.msra.mxu0 0.0
    %1789 = vmatprep.subr.mxu0 0.0
    %1790 = vmatpush1.msra.mxu0 0.0
    %1791 = vmatprep.subr.mxu0 0.0
    %1792 = vmatpush1.msra.mxu0 0.0
    %1793 = vmatprep.subr.mxu0 0.0
    %1794 = vmatpush1.msra.mxu0 0.0
    %1795 = vmatprep.subr.mxu0 0.0
    %1796 = vmatpush1.msra.mxu0 0.0
    %1797 = vmatprep.subr.mxu0 0.0
    %1798 = vmatpush1.msra.mxu0 0.0
    %1799 = vmatprep.subr.mxu0 0.0
    %1800 = vmatpush1.msra.mxu0 0.0
    %1801 = vmatprep.subr.mxu0 0.0
    %1802 = vmatpush1.msra.mxu0 0.0
    %1803 = vmatprep.mubr.f32.mxu0 0.0
    %v1804 = vand.u32 %v1501, 4294901760
    %v1805 = vsub.f32 %v1501, %v1804
    %v1806 = vand.u32 %v1805, 4294901760
    %1807 = vmatmul.mubr.f32.gmra.mrb[0].mxu0 %v1806
    %v1808 = vpop.f32.mrb[0].mxu0
    %v1809 = vadd.f32 %v1734, %v1808
    %v1810 = vpop.f32.mrb[0].mxu0
    %1811 = vdwg.mxu0
    %1812 = vmatprep.subr.mxu0 0.0
    %v1813 = vand.u32 %v1486, 4294901760
    %v1814 = vsub.f32 %v1486, %v1813
    %v1815 = vand.u32 %v1814, 4294901760
    %1816 = vmatpush1.msra.mxu0 %v1815
    %1817 = vmatprep.subr.mxu0 0.0
    %v1818 = vand.u32 %v1487, 4294901760
    %v1819 = vsub.f32 %v1487, %v1818
    %v1820 = vand.u32 %v1819, 4294901760
    %1821 = vmatpush1.msra.mxu0 %v1820
    %1822 = vmatprep.subr.mxu0 0.0
    %1823 = vmatpush1.msra.mxu0 0.0
    %1824 = vmatprep.subr.mxu0 0.0
    %1825 = vmatpush1.msra.mxu0 0.0
    %1826 = vmatprep.subr.mxu0 0.0
    %1827 = vmatpush1.msra.mxu0 0.0
    %1828 = vmatprep.subr.mxu0 0.0
    %1829 = vmatpush1.msra.mxu0 0.0
    %1830 = vmatprep.subr.mxu0 0.0
    %1831 = vmatpush1.msra.mxu0 0.0
    %1832 = vmatprep.subr.mxu0 0.0
    %1833 = vmatpush1.msra.mxu0 0.0
    %1834 = vmatprep.subr.mxu0 0.0
    %1835 = vmatpush1.msra.mxu0 0.0
    %1836 = vmatprep.subr.mxu0 0.0
    %1837 = vmatpush1.msra.mxu0 0.0
    %1838 = vmatprep.subr.mxu0 0.0
    %1839 = vmatpush1.msra.mxu0 0.0
    %1840 = vmatprep.subr.mxu0 0.0
    %1841 = vmatpush1.msra.mxu0 0.0
    %1842 = vmatprep.subr.mxu0 0.0
    %1843 = vmatpush1.msra.mxu0 0.0
    %1844 = vmatprep.subr.mxu0 0.0
    %1845 = vmatpush1.msra.mxu0 0.0
    %1846 = vmatprep.subr.mxu0 0.0
    %1847 = vmatpush1.msra.mxu0 0.0
    %1848 = vmatprep.subr.mxu0 0.0
    %1849 = vmatpush1.msra.mxu0 0.0
    %1850 = vmatprep.subr.mxu0 0.0
    %1851 = vmatpush1.msra.mxu0 0.0
    %1852 = vmatprep.subr.mxu0 0.0
    %1853 = vmatpush1.msra.mxu0 0.0
    %1854 = vmatprep.subr.mxu0 0.0
    %1855 = vmatpush1.msra.mxu0 0.0
    %1856 = vmatprep.subr.mxu0 0.0
    %1857 = vmatpush1.msra.mxu0 0.0
    %1858 = vmatprep.subr.mxu0 0.0
    %1859 = vmatpush1.msra.mxu0 0.0
    %1860 = vmatprep.subr.mxu0 0.0
    %1861 = vmatpush1.msra.mxu0 0.0
    %1862 = vmatprep.subr.mxu0 0.0
    %1863 = vmatpush1.msra.mxu0 0.0
    %1864 = vmatprep.subr.mxu0 0.0
    %1865 = vmatpush1.msra.mxu0 0.0
    %1866 = vmatprep.subr.mxu0 0.0
    %1867 = vmatpush1.msra.mxu0 0.0
    %1868 = vmatprep.subr.mxu0 0.0
    %1869 = vmatpush1.msra.mxu0 0.0
    %1870 = vmatprep.subr.mxu0 0.0
    %1871 = vmatpush1.msra.mxu0 0.0
    %1872 = vmatprep.subr.mxu0 0.0
    %1873 = vmatpush1.msra.mxu0 0.0
    %1874 = vmatprep.subr.mxu0 0.0
    %1875 = vmatpush1.msra.mxu0 0.0
    %1876 = vmatprep.subr.mxu0 0.0
    %1877 = vmatpush1.msra.mxu0 0.0
    %1878 = vmatprep.subr.mxu0 0.0
    %1879 = vmatpush1.msra.mxu0 0.0
    %1880 = vmatprep.subr.mxu0 0.0
    %1881 = vmatpush1.msra.mxu0 0.0
    %1882 = vmatprep.mubr.f32.mxu0 0.0
    %v1883 = vand.u32 %v1501, 4294901760
    %1884 = vmatmul.mubr.f32.gmra.mrb[0].mxu0 %v1883
    %v1885 = vpop.f32.mrb[0].mxu0
    %v1886 = vadd.f32 %v1809, %v1885
    %v1887 = vpop.f32.mrb[0].mxu0
    %1888 = vdwg.mxu0
    %1889 = vmatprep.subr.mxu0 0.0
    %v1890 = vand.u32 %v1486, 4294901760
    %1891 = vmatpush1.msra.mxu0 %v1890
    %1892 = vmatprep.subr.mxu0 0.0
    %v1893 = vand.u32 %v1487, 4294901760
    %1894 = vmatpush1.msra.mxu0 %v1893
    %1895 = vmatprep.subr.mxu0 0.0
    %1896 = vmatpush1.msra.mxu0 0.0
    %1897 = vmatprep.subr.mxu0 0.0
    %1898 = vmatpush1.msra.mxu0 0.0
    %1899 = vmatprep.subr.mxu0 0.0
    %1900 = vmatpush1.msra.mxu0 0.0
    %1901 = vmatprep.subr.mxu0 0.0
    %1902 = vmatpush1.msra.mxu0 0.0
    %1903 = vmatprep.subr.mxu0 0.0
    %1904 = vmatpush1.msra.mxu0 0.0
    %1905 = vmatprep.subr.mxu0 0.0
    %1906 = vmatpush1.msra.mxu0 0.0
    %1907 = vmatprep.subr.mxu0 0.0
    %1908 = vmatpush1.msra.mxu0 0.0
    %1909 = vmatprep.subr.mxu0 0.0
    %1910 = vmatpush1.msra.mxu0 0.0
    %1911 = vmatprep.subr.mxu0 0.0
    %1912 = vmatpush1.msra.mxu0 0.0
    %1913 = vmatprep.subr.mxu0 0.0
    %1914 = vmatpush1.msra.mxu0 0.0
    %1915 = vmatprep.subr.mxu0 0.0
    %1916 = vmatpush1.msra.mxu0 0.0
    %1917 = vmatprep.subr.mxu0 0.0
    %1918 = vmatpush1.msra.mxu0 0.0
    %1919 = vmatprep.subr.mxu0 0.0
    %1920 = vmatpush1.msra.mxu0 0.0
    %1921 = vmatprep.subr.mxu0 0.0
    %1922 = vmatpush1.msra.mxu0 0.0
    %1923 = vmatprep.subr.mxu0 0.0
    %1924 = vmatpush1.msra.mxu0 0.0
    %1925 = vmatprep.subr.mxu0 0.0
    %1926 = vmatpush1.msra.mxu0 0.0
    %1927 = vmatprep.subr.mxu0 0.0
    %1928 = vmatpush1.msra.mxu0 0.0
    %1929 = vmatprep.subr.mxu0 0.0
    %1930 = vmatpush1.msra.mxu0 0.0
    %1931 = vmatprep.subr.mxu0 0.0
    %1932 = vmatpush1.msra.mxu0 0.0
    %1933 = vmatprep.subr.mxu0 0.0
    %1934 = vmatpush1.msra.mxu0 0.0
    %1935 = vmatprep.subr.mxu0 0.0
    %1936 = vmatpush1.msra.mxu0 0.0
    %1937 = vmatprep.subr.mxu0 0.0
    %1938 = vmatpush1.msra.mxu0 0.0
    %1939 = vmatprep.subr.mxu0 0.0
    %1940 = vmatpush1.msra.mxu0 0.0
    %1941 = vmatprep.subr.mxu0 0.0
    %1942 = vmatpush1.msra.mxu0 0.0
    %1943 = vmatprep.subr.mxu0 0.0
    %1944 = vmatpush1.msra.mxu0 0.0
    %1945 = vmatprep.subr.mxu0 0.0
    %1946 = vmatpush1.msra.mxu0 0.0
    %1947 = vmatprep.subr.mxu0 0.0
    %1948 = vmatpush1.msra.mxu0 0.0
    %1949 = vmatprep.subr.mxu0 0.0
    %1950 = vmatpush1.msra.mxu0 0.0
    %1951 = vmatprep.subr.mxu0 0.0
    %1952 = vmatpush1.msra.mxu0 0.0
    %1953 = vmatprep.subr.mxu0 0.0
    %1954 = vmatpush1.msra.mxu0 0.0
    %1955 = vmatprep.mubr.f32.mxu0 0.0
    %v1956 = vand.u32 %v1501, 4294901760
    %1957 = vmatmul.mubr.f32.gmra.mrb[0].mxu0 %v1956
    %v1958 = vpop.f32.mrb[0].mxu0
    %v1959 = vadd.f32 %v1886, %v1958
    %v1960 = vpop.f32.mrb[0].mxu0
    %1961 = vdwg.mxu0
    %v1962 = vand.u32 2147483647, %v1959
    %v1963 = vsub.f32 0.0, %v1962
    %v1964 = vmul.f32 %v1963, 1.442695
    %v1965 = vpow.pop %v1964
    %v1966 = vadd.f32 %v1965, 1.0
    %v1967 = vrcp.pop %v1966
    %v1968 = vmul.f32 1.0, %v1967
    %vm1969 = vcmp.ge.f32.partialorder %v1959, 0.0
    %v1970 = vmul.f32 %v1965, %v1968
    %v1971 = vsel %vm1969, %v1968, %v1970
    %1972 = vst [vmem:[#allocation3] sm:$0x1] %v1971
    // Predicated region
    $region30: #{tpu_custom_call.1} parent=1 // pred_check
      _
    $region31: #{tpu_custom_call.1} parent=1 // pred_check_branch
      %1974 = sbr.rel (0) target = $region33
    $region32: #{tpu_custom_call.1} parent=1 // pred_region
      %s1976 = ssub.s32 16, 16
      %1977 = vsyncadd [#allocation4], %s1976
      %s1979 = sshll.u32 [#allocation3], 4
      %s1980 = int_to_ptr.vmem [resolvable:$true] %s1979
      %1982 = dma.vmem_to_hbm [thread:$0]  %s1980, 16, %s7, [#allocation4]
    $region33: #{tpu_custom_call.1} parent=1 // pred_fallthru
      _
    // Predicated region
    $region34: #{tpu_custom_call.1} parent=1 // pred_check
      _
    $region35: #{tpu_custom_call.1} parent=1 // pred_check_branch
      %1984 = sbr.rel (0) target = $region37
    $region36: #{tpu_custom_call.1} parent=1 // pred_region
      %1985 = dma.done [#allocation4], 16
    $region37: #{tpu_custom_call.1} parent=1 // pred_fallthru
      _
    %1986 = vsyncpa [#allocation4], 1

</llo_original>
